<compile_context>
chip_gen: v7x
topology: tpu7x:2x2x1
jax: 0.10.0
libtpu: 0.0.40
codegen_flags: <defaults>
</compile_context>

<pallas_src>
import jax
import jax.numpy as jnp
from jax.experimental import pallas as pl
from jax.experimental.pallas import tpu as pltpu

SIGMA_DATA = 1.0

_MAX_TM = 8192  # per-step footprint stays ~MBs even at this tile size


def edm_precond_kernel(xs_ref, w1t_ref, b1_ref, wt_ref, w2_ref, b2_ref,
                       out_ref):
    # xs_ref  : (D+1, TM)  rows 0..D-1 = channels-first x, row D = per-row sigma
    # w1t_ref : (H, D)     W1.T          (resident across grid steps)
    # b1_ref  : (H, 1)
    # wt_ref  : (H, 1)     noise-embedding weights
    # w2_ref  : (H, D)
    # b2_ref  : (D, 1)
    # out_ref : (D, TM)
    D = out_ref.shape[0]
    TM = out_ref.shape[1]
    sd2 = SIGMA_DATA * SIGMA_DATA

    # Hoist the tiny resident weights once per grid step.
    w1t = w1t_ref[...]            # (H, D)
    b1 = b1_ref[...]              # (H, 1)
    wt = wt_ref[...]              # (H, 1)
    w2 = w2_ref[...]              # (H, D)
    b2 = b2_ref[...]              # (D, 1)

    # Lane-chunk the tile so the (H, C) hidden / GELU temporaries stay small
    # (bounded live ranges -> VALU/EUP-bound, not vld/vst-bound).  Offsets are
    # static Python ints, i.e. a fully unrolled chunk loop.
    C = 512 if TM % 512 == 0 else (256 if TM % 256 == 0 else 128)
    n_chunks = TM // C

    for ci in range(n_chunks):
        c0 = ci * C
        xs = xs_ref[:, c0:c0 + C]                     # (D+1, C)
        x = xs[:D, :]                                 # (D, C)
        sigma = xs[D:D + 1, :]                        # (1, C)

        # ---- EDM preconditioning (per-row, lane-dense) ----
        r = jax.lax.rsqrt(sigma * sigma + sd2)        # EUP rsqrt
        x_in = r * x                                  # c_in * x
        c_out = (SIGMA_DATA * sigma) * r
        c_noise = 0.25 * jnp.log(sigma)               # EUP log

        # ---- layer 1: K = D = 3 contraction -> D broadcast-FMAs (VPU) ----
        h = b1 + wt * c_noise                         # (H, C)
        for d in range(D):
            h = h + w1t[:, d:d + 1] * x_in[d:d + 1, :]

        # tanh-GELU -> transcendental goes to the EUP slot.
        h = jax.nn.gelu(h, approximate=True)

        # ---- layer 2 (sublane reductions, XLU) + final combine, stored
        # per output channel (no concatenate) ----
        skip = (sd2 * r) * x_in                       # c_skip * x, reuses x_in
        for d in range(D):
            f_d = jnp.sum(w2[:, d:d + 1] * h, axis=0, keepdims=True)
            f_d = f_d + b2[d:d + 1, :]                # (1, C)
            out_ref[d:d + 1, c0:c0 + C] = (
                skip[d:d + 1, :] + c_out * f_d).astype(out_ref.dtype)


def _num_tensorcores():
    # v7x (and v4/v5p megacore) expose 2 TensorCores per device; v5e/v6e 1.
    try:
        kind = jax.devices()[0].device_kind.lower()
    except Exception:
        return 1
    return 2 if any(s in kind for s in ("v7", "v4", "v5p")) else 1


def _largest_aligned_divisor(mp, cap):
    cap = max(128, min(cap, mp))
    cap -= cap % 128
    t = cap
    while t >= 128:
        if mp % t == 0:
            return t
        t -= 128
    return 128


def _pick_row_tile(mp, num_cores, max_tm=_MAX_TM):
    """mp is a multiple of 128."""
    if num_cores >= 2:
        # 2-TC chips: want >=2 steps with an even step count so both cores
        # get equal work.
        t = _largest_aligned_divisor(mp, min(max_tm, max(128, mp // 2)))
        while t > 128 and (mp // t) % 2 != 0:
            nt = _largest_aligned_divisor(mp, t - 128)
            if nt == t:
                break
            t = nt
        return t
    # Single-TC chips: one maximal tile when it fits (no wasted pipeline
    # steps); otherwise the largest aligned divisor under the cap.
    if mp <= max_tm:
        return mp
    return _largest_aligned_divisor(mp, max_tm)


def edm_precond_forward(x, sigma, params):
    """x: (B, N, D) f32, sigma: (B,) f32 -> denoised (B, N, D) f32."""
    B, N, D = x.shape
    w1, b1, wt, w2, b2 = params
    H = w1.shape[1]
    M = B * N

    # Lane-dense channels-first slab with sigma fused in as an extra row.
    x_t = x.reshape(M, D).T                                   # (D, M)
    sig_rows = jnp.broadcast_to(sigma[:, None], (B, N)).reshape(1, M)

    # Pad rows up to a multiple of 128 (sigma padded with 1.0 so log() stays
    # finite; padded rows are sliced off afterwards).
    Mp = ((M + 127) // 128) * 128
    if Mp != M:
        pad = Mp - M
        x_t = jnp.pad(x_t, ((0, 0), (0, pad)))
        sig_rows = jnp.pad(sig_rows, ((0, 0), (0, pad)), constant_values=1.0)
    xs = jnp.concatenate([x_t, sig_rows], axis=0)             # (D+1, Mp)

    num_cores = _num_tensorcores()
    TM = _pick_row_tile(Mp, num_cores)
    grid = (Mp // TM,)

    w1t = w1.T                                                # (H, D)
    b1c = b1.reshape(H, 1)
    wtc = wt.reshape(H, 1)
    b2c = b2.reshape(D, 1)

    cost = pl.CostEstimate(
        flops=int((2 * (D + 1) * H + 2 * H * D + 12 * D) * M),
        transcendentals=int((H + 3) * M),
        bytes_accessed=int((2 * D + 1) * 4 * M),
    )

    out_t = pl.pallas_call(
        edm_precond_kernel,
        out_shape=jax.ShapeDtypeStruct((D, Mp), x.dtype),
        grid=grid,
        in_specs=[
            pl.BlockSpec((D + 1, TM), lambda i: (0, i)),      # x + sigma slab
            pl.BlockSpec((H, D), lambda i: (0, 0)),           # W1.T (resident)
            pl.BlockSpec((H, 1), lambda i: (0, 0)),           # b1   (resident)
            pl.BlockSpec((H, 1), lambda i: (0, 0)),           # Wt   (resident)
            pl.BlockSpec((H, D), lambda i: (0, 0)),           # W2   (resident)
            pl.BlockSpec((D, 1), lambda i: (0, 0)),           # b2   (resident)
        ],
        out_specs=pl.BlockSpec((D, TM), lambda i: (0, i)),
        compiler_params=pltpu.CompilerParams(
            dimension_semantics=("parallel",),
            vmem_limit_bytes=32 * 1024 * 1024,
        ),
        cost_estimate=cost,
    )(xs, w1t, b1c, wtc, w2, b2c)

    return out_t[:, :M].T.reshape(B, N, D)


def edm_precond_reference(x, sigma, params):
    """Pure-JAX reference mirroring PyTorch EDMPrecond.forward semantics
    (same tanh-GELU backbone as the kernel)."""
    w1, b1, wt, w2, b2 = params
    s = sigma.reshape(-1, *([1] * (x.ndim - 1)))              # (B, 1, 1)
    c_skip = SIGMA_DATA ** 2 / (s ** 2 + SIGMA_DATA ** 2)
    c_out = s * SIGMA_DATA / jnp.sqrt(s ** 2 + SIGMA_DATA ** 2)
    c_in = 1.0 / jnp.sqrt(SIGMA_DATA ** 2 + s ** 2)
    c_noise = jnp.log(s) / 4.0
    h = jnp.einsum("bnd,dh->bnh", c_in * x, w1) + b1 + c_noise * wt
    h = jax.nn.gelu(h, approximate=True)
    f_x = jnp.einsum("bnh,hd->bnd", h, w2) + b2
    return c_skip * x + c_out * f_x


if __name__ == "__main__":
    B, N, D, H = 4, 256, 3, 32

    key = jax.random.PRNGKey(0)
    kx, ks, k1, k2, k3, k4, k5 = jax.random.split(key, 7)

    x = jax.random.normal(kx, (B, N, D), dtype=jnp.float32)
    sigma = jnp.exp(jax.random.normal(ks, (B,), dtype=jnp.float32))  # positive

    # Deterministic synthetic backbone parameters.
    w1 = jax.random.normal(k1, (D, H), dtype=jnp.float32) * 0.5
    b1 = jax.random.normal(k2, (1, H), dtype=jnp.float32) * 0.1
    wt = jax.random.normal(k3, (1, H), dtype=jnp.float32) * 0.1
    w2 = jax.random.normal(k4, (H, D), dtype=jnp.float32) * 0.2
    b2 = jax.random.normal(k5, (1, D), dtype=jnp.float32) * 0.1
    params = (w1, b1, wt, w2, b2)

    denoised = edm_precond_forward(x, sigma, params)
    denoised = jax.block_until_ready(denoised)

    ref = edm_precond_reference(x, sigma, params)
    assert denoised.shape == (B, N, D)
    err = float(jnp.max(jnp.abs(denoised - ref)))
    assert jnp.allclose(denoised, ref, atol=1e-4, rtol=1e-4), err

    print("KERNEL_OK")
</pallas_src>

<mosaic_0001>
module attributes {stable_mosaic.version = 11 : i64} {
  func.func @edm_precond_kernel(%arg0: i32, %arg1: memref<4x1024xf32, #tpu.memory_space<vmem>>, %arg2: memref<32x3xf32, #tpu.memory_space<vmem>>, %arg3: memref<32x1xf32, #tpu.memory_space<vmem>>, %arg4: memref<32x1xf32, #tpu.memory_space<vmem>>, %arg5: memref<32x3xf32, #tpu.memory_space<vmem>>, %arg6: memref<3x1xf32, #tpu.memory_space<vmem>>, %arg7: memref<3x1024xf32, #tpu.memory_space<vmem>>) attributes {dimension_semantics = [#tpu.dimension_semantics<parallel>], iteration_bounds = array<i64: 1>, scalar_prefetch = 0 : i64, scratch_operands = 0 : i64, tpu.core_type = #tpu.core_type<tc>, window_params = [{transform_indices = @transform_0, window_bounds = array<i64: 4, 1024>}, {pipeline_mode = #tpu.pipeline_mode<synchronous>, transform_indices = @transform_1, window_bounds = array<i64: 32, 3>}, {pipeline_mode = #tpu.pipeline_mode<synchronous>, transform_indices = @transform_2, window_bounds = array<i64: 32, 1>}, {pipeline_mode = #tpu.pipeline_mode<synchronous>, transform_indices = @transform_3, window_bounds = array<i64: 32, 1>}, {pipeline_mode = #tpu.pipeline_mode<synchronous>, transform_indices = @transform_4, window_bounds = array<i64: 32, 3>}, {pipeline_mode = #tpu.pipeline_mode<synchronous>, transform_indices = @transform_5, window_bounds = array<i64: 3, 1>}, {transform_indices = @transform_6, window_bounds = array<i64: 3, 1024>}]} {
    %c0 = arith.constant 0 : index
    %c0_0 = arith.constant 0 : index
    %0 = vector.load %arg2[%c0, %c0_0] : memref<32x3xf32, #tpu.memory_space<vmem>>, vector<32x3xf32>
    %c0_1 = arith.constant 0 : index
    %c0_2 = arith.constant 0 : index
    %1 = vector.load %arg3[%c0_1, %c0_2] : memref<32x1xf32, #tpu.memory_space<vmem>>, vector<32x1xf32>
    %c0_3 = arith.constant 0 : index
    %c0_4 = arith.constant 0 : index
    %2 = vector.load %arg4[%c0_3, %c0_4] : memref<32x1xf32, #tpu.memory_space<vmem>>, vector<32x1xf32>
    %c0_5 = arith.constant 0 : index
    %c0_6 = arith.constant 0 : index
    %3 = vector.load %arg5[%c0_5, %c0_6] : memref<32x3xf32, #tpu.memory_space<vmem>>, vector<32x3xf32>
    %c0_7 = arith.constant 0 : index
    %c0_8 = arith.constant 0 : index
    %4 = vector.load %arg6[%c0_7, %c0_8] : memref<3x1xf32, #tpu.memory_space<vmem>>, vector<3x1xf32>
    %c0_9 = arith.constant 0 : index
    %c0_10 = arith.constant 0 : index
    %5 = vector.load %arg1[%c0_9, %c0_10] : memref<4x1024xf32, #tpu.memory_space<vmem>>, vector<4x512xf32>
    %6 = vector.extract_strided_slice %5 {offsets = [0, 0], sizes = [3, 512], strides = [1, 1]} : vector<4x512xf32> to vector<3x512xf32>
    %7 = vector.extract_strided_slice %5 {offsets = [3, 0], sizes = [1, 512], strides = [1, 1]} : vector<4x512xf32> to vector<1x512xf32>
    %8 = arith.mulf %7, %7 : vector<1x512xf32>
    %cst = arith.constant 1.000000e+00 : f32
    %9 = vector.broadcast %cst : f32 to vector<1x512xf32>
    %10 = arith.addf %8, %9 : vector<1x512xf32>
    %11 = math.rsqrt %10 : vector<1x512xf32>
    %12 = vector.broadcast %11 : vector<1x512xf32> to vector<3x512xf32>
    %13 = arith.mulf %12, %6 : vector<3x512xf32>
    %cst_11 = arith.constant 1.000000e+00 : f32
    %14 = vector.broadcast %cst_11 : f32 to vector<1x512xf32>
    %15 = arith.mulf %14, %7 : vector<1x512xf32>
    %16 = arith.mulf %15, %11 : vector<1x512xf32>
    %17 = math.log %7 : vector<1x512xf32>
    %cst_12 = arith.constant 2.500000e-01 : f32
    %18 = vector.broadcast %cst_12 : f32 to vector<1x512xf32>
    %19 = arith.mulf %18, %17 : vector<1x512xf32>
    %20 = vector.broadcast %2 : vector<32x1xf32> to vector<32x512xf32>
    %21 = vector.broadcast %19 : vector<1x512xf32> to vector<32x512xf32>
    %22 = arith.mulf %20, %21 : vector<32x512xf32>
    %23 = vector.broadcast %1 : vector<32x1xf32> to vector<32x512xf32>
    %24 = arith.addf %23, %22 : vector<32x512xf32>
    %25 = vector.extract_strided_slice %0 {offsets = [0, 0], sizes = [32, 1], strides = [1, 1]} : vector<32x3xf32> to vector<32x1xf32>
    %26 = vector.extract_strided_slice %13 {offsets = [0, 0], sizes = [1, 512], strides = [1, 1]} : vector<3x512xf32> to vector<1x512xf32>
    %27 = vector.broadcast %25 : vector<32x1xf32> to vector<32x512xf32>
    %28 = vector.broadcast %26 : vector<1x512xf32> to vector<32x512xf32>
    %29 = arith.mulf %27, %28 : vector<32x512xf32>
    %30 = arith.addf %24, %29 : vector<32x512xf32>
    %31 = vector.extract_strided_slice %0 {offsets = [0, 1], sizes = [32, 1], strides = [1, 1]} : vector<32x3xf32> to vector<32x1xf32>
    %32 = vector.extract_strided_slice %13 {offsets = [1, 0], sizes = [1, 512], strides = [1, 1]} : vector<3x512xf32> to vector<1x512xf32>
    %33 = vector.broadcast %31 : vector<32x1xf32> to vector<32x512xf32>
    %34 = vector.broadcast %32 : vector<1x512xf32> to vector<32x512xf32>
    %35 = arith.mulf %33, %34 : vector<32x512xf32>
    %36 = arith.addf %30, %35 : vector<32x512xf32>
    %37 = vector.extract_strided_slice %0 {offsets = [0, 2], sizes = [32, 1], strides = [1, 1]} : vector<32x3xf32> to vector<32x1xf32>
    %38 = vector.extract_strided_slice %13 {offsets = [2, 0], sizes = [1, 512], strides = [1, 1]} : vector<3x512xf32> to vector<1x512xf32>
    %39 = vector.broadcast %37 : vector<32x1xf32> to vector<32x512xf32>
    %40 = vector.broadcast %38 : vector<1x512xf32> to vector<32x512xf32>
    %41 = arith.mulf %39, %40 : vector<32x512xf32>
    %42 = arith.addf %36, %41 : vector<32x512xf32>
    %43 = arith.mulf %42, %42 : vector<32x512xf32>
    %44 = arith.mulf %42, %43 : vector<32x512xf32>
    %cst_13 = arith.constant 4.471500e-02 : f32
    %45 = vector.broadcast %cst_13 : f32 to vector<32x512xf32>
    %46 = arith.mulf %45, %44 : vector<32x512xf32>
    %47 = arith.addf %42, %46 : vector<32x512xf32>
    %cst_14 = arith.constant 0.797884583 : f32
    %48 = vector.broadcast %cst_14 : f32 to vector<32x512xf32>
    %49 = arith.mulf %48, %47 : vector<32x512xf32>
    %50 = math.tanh %49 : vector<32x512xf32>
    %cst_15 = arith.constant 1.000000e+00 : f32
    %51 = vector.broadcast %cst_15 : f32 to vector<32x512xf32>
    %52 = arith.addf %51, %50 : vector<32x512xf32>
    %cst_16 = arith.constant 5.000000e-01 : f32
    %53 = vector.broadcast %cst_16 : f32 to vector<32x512xf32>
    %54 = arith.mulf %53, %52 : vector<32x512xf32>
    %55 = arith.mulf %42, %54 : vector<32x512xf32>
    %cst_17 = arith.constant 1.000000e+00 : f32
    %56 = vector.broadcast %cst_17 : f32 to vector<1x512xf32>
    %57 = arith.mulf %56, %11 : vector<1x512xf32>
    %58 = vector.broadcast %57 : vector<1x512xf32> to vector<3x512xf32>
    %59 = arith.mulf %58, %13 : vector<3x512xf32>
    %60 = vector.extract_strided_slice %3 {offsets = [0, 0], sizes = [32, 1], strides = [1, 1]} : vector<32x3xf32> to vector<32x1xf32>
    %61 = vector.broadcast %60 : vector<32x1xf32> to vector<32x512xf32>
    %62 = arith.mulf %61, %55 : vector<32x512xf32>
    %cst_18 = arith.constant dense<0.000000e+00> : vector<512xf32>
    %63 = vector.multi_reduction <add>, %62, %cst_18 [0] : vector<32x512xf32> to vector<512xf32>
    %64 = vector.shape_cast %63 : vector<512xf32> to vector<1x512xf32>
    %65 = vector.extract_strided_slice %4 {offsets = [0, 0], sizes = [1, 1], strides = [1, 1]} : vector<3x1xf32> to vector<1x1xf32>
    %66 = vector.broadcast %65 : vector<1x1xf32> to vector<1x512xf32>
    %67 = arith.addf %64, %66 : vector<1x512xf32>
    %68 = vector.extract_strided_slice %59 {offsets = [0, 0], sizes = [1, 512], strides = [1, 1]} : vector<3x512xf32> to vector<1x512xf32>
    %69 = arith.mulf %16, %67 : vector<1x512xf32>
    %70 = arith.addf %68, %69 : vector<1x512xf32>
    %c0_19 = arith.constant 0 : index
    %c0_20 = arith.constant 0 : index
    %71 = vector.load %arg7[%c0_19, %c0_20] : memref<3x1024xf32, #tpu.memory_space<vmem>>, vector<1x512xf32>
    tpu.vector_store %arg7[%c0_19, %c0_20], %70 {strides = array<i32>} : memref<3x1024xf32, #tpu.memory_space<vmem>>, vector<1x512xf32>,
    %72 = vector.extract_strided_slice %3 {offsets = [0, 1], sizes = [32, 1], strides = [1, 1]} : vector<32x3xf32> to vector<32x1xf32>
    %73 = vector.broadcast %72 : vector<32x1xf32> to vector<32x512xf32>
    %74 = arith.mulf %73, %55 : vector<32x512xf32>
    %cst_21 = arith.constant dense<0.000000e+00> : vector<512xf32>
    %75 = vector.multi_reduction <add>, %74, %cst_21 [0] : vector<32x512xf32> to vector<512xf32>
    %76 = vector.shape_cast %75 : vector<512xf32> to vector<1x512xf32>
    %77 = vector.extract_strided_slice %4 {offsets = [1, 0], sizes = [1, 1], strides = [1, 1]} : vector<3x1xf32> to vector<1x1xf32>
    %78 = vector.broadcast %77 : vector<1x1xf32> to vector<1x512xf32>
    %79 = arith.addf %76, %78 : vector<1x512xf32>
    %80 = vector.extract_strided_slice %59 {offsets = [1, 0], sizes = [1, 512], strides = [1, 1]} : vector<3x512xf32> to vector<1x512xf32>
    %81 = arith.mulf %16, %79 : vector<1x512xf32>
    %82 = arith.addf %80, %81 : vector<1x512xf32>
    %c1 = arith.constant 1 : index
    %c0_22 = arith.constant 0 : index
    %83 = vector.load %arg7[%c1, %c0_22] : memref<3x1024xf32, #tpu.memory_space<vmem>>, vector<1x512xf32>
    tpu.vector_store %arg7[%c1, %c0_22], %82 {strides = array<i32>} : memref<3x1024xf32, #tpu.memory_space<vmem>>, vector<1x512xf32>,
    %84 = vector.extract_strided_slice %3 {offsets = [0, 2], sizes = [32, 1], strides = [1, 1]} : vector<32x3xf32> to vector<32x1xf32>
    %85 = vector.broadcast %84 : vector<32x1xf32> to vector<32x512xf32>
    %86 = arith.mulf %85, %55 : vector<32x512xf32>
    %cst_23 = arith.constant dense<0.000000e+00> : vector<512xf32>
    %87 = vector.multi_reduction <add>, %86, %cst_23 [0] : vector<32x512xf32> to vector<512xf32>
    %88 = vector.shape_cast %87 : vector<512xf32> to vector<1x512xf32>
    %89 = vector.extract_strided_slice %4 {offsets = [2, 0], sizes = [1, 1], strides = [1, 1]} : vector<3x1xf32> to vector<1x1xf32>
    %90 = vector.broadcast %89 : vector<1x1xf32> to vector<1x512xf32>
    %91 = arith.addf %88, %90 : vector<1x512xf32>
    %92 = vector.extract_strided_slice %59 {offsets = [2, 0], sizes = [1, 512], strides = [1, 1]} : vector<3x512xf32> to vector<1x512xf32>
    %93 = arith.mulf %16, %91 : vector<1x512xf32>
    %94 = arith.addf %92, %93 : vector<1x512xf32>
    %c2 = arith.constant 2 : index
    %c0_24 = arith.constant 0 : index
    %95 = vector.load %arg7[%c2, %c0_24] : memref<3x1024xf32, #tpu.memory_space<vmem>>, vector<1x512xf32>
    tpu.vector_store %arg7[%c2, %c0_24], %94 {strides = array<i32>} : memref<3x1024xf32, #tpu.memory_space<vmem>>, vector<1x512xf32>,
    %c0_25 = arith.constant 0 : index
    %c512 = arith.constant 512 : index
    %96 = vector.load %arg1[%c0_25, %c512] : memref<4x1024xf32, #tpu.memory_space<vmem>>, vector<4x512xf32>
    %97 = vector.extract_strided_slice %96 {offsets = [0, 0], sizes = [3, 512], strides = [1, 1]} : vector<4x512xf32> to vector<3x512xf32>
    %98 = vector.extract_strided_slice %96 {offsets = [3, 0], sizes = [1, 512], strides = [1, 1]} : vector<4x512xf32> to vector<1x512xf32>
    %99 = arith.mulf %98, %98 : vector<1x512xf32>
    %cst_26 = arith.constant 1.000000e+00 : f32
    %100 = vector.broadcast %cst_26 : f32 to vector<1x512xf32>
    %101 = arith.addf %99, %100 : vector<1x512xf32>
    %102 = math.rsqrt %101 : vector<1x512xf32>
    %103 = vector.broadcast %102 : vector<1x512xf32> to vector<3x512xf32>
    %104 = arith.mulf %103, %97 : vector<3x512xf32>
    %cst_27 = arith.constant 1.000000e+00 : f32
    %105 = vector.broadcast %cst_27 : f32 to vector<1x512xf32>
    %106 = arith.mulf %105, %98 : vector<1x512xf32>
    %107 = arith.mulf %106, %102 : vector<1x512xf32>
    %108 = math.log %98 : vector<1x512xf32>
    %cst_28 = arith.constant 2.500000e-01 : f32
    %109 = vector.broadcast %cst_28 : f32 to vector<1x512xf32>
    %110 = arith.mulf %109, %108 : vector<1x512xf32>
    %111 = vector.broadcast %2 : vector<32x1xf32> to vector<32x512xf32>
    %112 = vector.broadcast %110 : vector<1x512xf32> to vector<32x512xf32>
    %113 = arith.mulf %111, %112 : vector<32x512xf32>
    %114 = vector.broadcast %1 : vector<32x1xf32> to vector<32x512xf32>
    %115 = arith.addf %114, %113 : vector<32x512xf32>
    %116 = vector.extract_strided_slice %0 {offsets = [0, 0], sizes = [32, 1], strides = [1, 1]} : vector<32x3xf32> to vector<32x1xf32>
    %117 = vector.extract_strided_slice %104 {offsets = [0, 0], sizes = [1, 512], strides = [1, 1]} : vector<3x512xf32> to vector<1x512xf32>
    %118 = vector.broadcast %116 : vector<32x1xf32> to vector<32x512xf32>
    %119 = vector.broadcast %117 : vector<1x512xf32> to vector<32x512xf32>
    %120 = arith.mulf %118, %119 : vector<32x512xf32>
    %121 = arith.addf %115, %120 : vector<32x512xf32>
    %122 = vector.extract_strided_slice %0 {offsets = [0, 1], sizes = [32, 1], strides = [1, 1]} : vector<32x3xf32> to vector<32x1xf32>
    %123 = vector.extract_strided_slice %104 {offsets = [1, 0], sizes = [1, 512], strides = [1, 1]} : vector<3x512xf32> to vector<1x512xf32>
    %124 = vector.broadcast %122 : vector<32x1xf32> to vector<32x512xf32>
    %125 = vector.broadcast %123 : vector<1x512xf32> to vector<32x512xf32>
    %126 = arith.mulf %124, %125 : vector<32x512xf32>
    %127 = arith.addf %121, %126 : vector<32x512xf32>
    %128 = vector.extract_strided_slice %0 {offsets = [0, 2], sizes = [32, 1], strides = [1, 1]} : vector<32x3xf32> to vector<32x1xf32>
    %129 = vector.extract_strided_slice %104 {offsets = [2, 0], sizes = [1, 512], strides = [1, 1]} : vector<3x512xf32> to vector<1x512xf32>
    %130 = vector.broadcast %128 : vector<32x1xf32> to vector<32x512xf32>
    %131 = vector.broadcast %129 : vector<1x512xf32> to vector<32x512xf32>
    %132 = arith.mulf %130, %131 : vector<32x512xf32>
    %133 = arith.addf %127, %132 : vector<32x512xf32>
    %134 = arith.mulf %133, %133 : vector<32x512xf32>
    %135 = arith.mulf %133, %134 : vector<32x512xf32>
    %cst_29 = arith.constant 4.471500e-02 : f32
    %136 = vector.broadcast %cst_29 : f32 to vector<32x512xf32>
    %137 = arith.mulf %136, %135 : vector<32x512xf32>
    %138 = arith.addf %133, %137 : vector<32x512xf32>
    %cst_30 = arith.constant 0.797884583 : f32
    %139 = vector.broadcast %cst_30 : f32 to vector<32x512xf32>
    %140 = arith.mulf %139, %138 : vector<32x512xf32>
    %141 = math.tanh %140 : vector<32x512xf32>
    %cst_31 = arith.constant 1.000000e+00 : f32
    %142 = vector.broadcast %cst_31 : f32 to vector<32x512xf32>
    %143 = arith.addf %142, %141 : vector<32x512xf32>
    %cst_32 = arith.constant 5.000000e-01 : f32
    %144 = vector.broadcast %cst_32 : f32 to vector<32x512xf32>
    %145 = arith.mulf %144, %143 : vector<32x512xf32>
    %146 = arith.mulf %133, %145 : vector<32x512xf32>
    %cst_33 = arith.constant 1.000000e+00 : f32
    %147 = vector.broadcast %cst_33 : f32 to vector<1x512xf32>
    %148 = arith.mulf %147, %102 : vector<1x512xf32>
    %149 = vector.broadcast %148 : vector<1x512xf32> to vector<3x512xf32>
    %150 = arith.mulf %149, %104 : vector<3x512xf32>
    %151 = vector.extract_strided_slice %3 {offsets = [0, 0], sizes = [32, 1], strides = [1, 1]} : vector<32x3xf32> to vector<32x1xf32>
    %152 = vector.broadcast %151 : vector<32x1xf32> to vector<32x512xf32>
    %153 = arith.mulf %152, %146 : vector<32x512xf32>
    %cst_34 = arith.constant dense<0.000000e+00> : vector<512xf32>
    %154 = vector.multi_reduction <add>, %153, %cst_34 [0] : vector<32x512xf32> to vector<512xf32>
    %155 = vector.shape_cast %154 : vector<512xf32> to vector<1x512xf32>
    %156 = vector.extract_strided_slice %4 {offsets = [0, 0], sizes = [1, 1], strides = [1, 1]} : vector<3x1xf32> to vector<1x1xf32>
    %157 = vector.broadcast %156 : vector<1x1xf32> to vector<1x512xf32>
    %158 = arith.addf %155, %157 : vector<1x512xf32>
    %159 = vector.extract_strided_slice %150 {offsets = [0, 0], sizes = [1, 512], strides = [1, 1]} : vector<3x512xf32> to vector<1x512xf32>
    %160 = arith.mulf %107, %158 : vector<1x512xf32>
    %161 = arith.addf %159, %160 : vector<1x512xf32>
    %c0_35 = arith.constant 0 : index
    %c512_36 = arith.constant 512 : index
    %162 = vector.load %arg7[%c0_35, %c512_36] : memref<3x1024xf32, #tpu.memory_space<vmem>>, vector<1x512xf32>
    tpu.vector_store %arg7[%c0_35, %c512_36], %161 {strides = array<i32>} : memref<3x1024xf32, #tpu.memory_space<vmem>>, vector<1x512xf32>,
    %163 = vector.extract_strided_slice %3 {offsets = [0, 1], sizes = [32, 1], strides = [1, 1]} : vector<32x3xf32> to vector<32x1xf32>
    %164 = vector.broadcast %163 : vector<32x1xf32> to vector<32x512xf32>
    %165 = arith.mulf %164, %146 : vector<32x512xf32>
    %cst_37 = arith.constant dense<0.000000e+00> : vector<512xf32>
    %166 = vector.multi_reduction <add>, %165, %cst_37 [0] : vector<32x512xf32> to vector<512xf32>
    %167 = vector.shape_cast %166 : vector<512xf32> to vector<1x512xf32>
    %168 = vector.extract_strided_slice %4 {offsets = [1, 0], sizes = [1, 1], strides = [1, 1]} : vector<3x1xf32> to vector<1x1xf32>
    %169 = vector.broadcast %168 : vector<1x1xf32> to vector<1x512xf32>
    %170 = arith.addf %167, %169 : vector<1x512xf32>
    %171 = vector.extract_strided_slice %150 {offsets = [1, 0], sizes = [1, 512], strides = [1, 1]} : vector<3x512xf32> to vector<1x512xf32>
    %172 = arith.mulf %107, %170 : vector<1x512xf32>
    %173 = arith.addf %171, %172 : vector<1x512xf32>
    %c1_38 = arith.constant 1 : index
    %c512_39 = arith.constant 512 : index
    %174 = vector.load %arg7[%c1_38, %c512_39] : memref<3x1024xf32, #tpu.memory_space<vmem>>, vector<1x512xf32>
    tpu.vector_store %arg7[%c1_38, %c512_39], %173 {strides = array<i32>} : memref<3x1024xf32, #tpu.memory_space<vmem>>, vector<1x512xf32>,
    %175 = vector.extract_strided_slice %3 {offsets = [0, 2], sizes = [32, 1], strides = [1, 1]} : vector<32x3xf32> to vector<32x1xf32>
    %176 = vector.broadcast %175 : vector<32x1xf32> to vector<32x512xf32>
    %177 = arith.mulf %176, %146 : vector<32x512xf32>
    %cst_40 = arith.constant dense<0.000000e+00> : vector<512xf32>
    %178 = vector.multi_reduction <add>, %177, %cst_40 [0] : vector<32x512xf32> to vector<512xf32>
    %179 = vector.shape_cast %178 : vector<512xf32> to vector<1x512xf32>
    %180 = vector.extract_strided_slice %4 {offsets = [2, 0], sizes = [1, 1], strides = [1, 1]} : vector<3x1xf32> to vector<1x1xf32>
    %181 = vector.broadcast %180 : vector<1x1xf32> to vector<1x512xf32>
    %182 = arith.addf %179, %181 : vector<1x512xf32>
    %183 = vector.extract_strided_slice %150 {offsets = [2, 0], sizes = [1, 512], strides = [1, 1]} : vector<3x512xf32> to vector<1x512xf32>
    %184 = arith.mulf %107, %182 : vector<1x512xf32>
    %185 = arith.addf %183, %184 : vector<1x512xf32>
    %c2_41 = arith.constant 2 : index
    %c512_42 = arith.constant 512 : index
    %186 = vector.load %arg7[%c2_41, %c512_42] : memref<3x1024xf32, #tpu.memory_space<vmem>>, vector<1x512xf32>
    tpu.vector_store %arg7[%c2_41, %c512_42], %185 {strides = array<i32>} : memref<3x1024xf32, #tpu.memory_space<vmem>>, vector<1x512xf32>,
    return
  }
  func.func @transform_0(%arg0: i32) -> (i32, i32) {
    %c0_i32 = arith.constant 0 : i32
    %c0_i32_0 = arith.constant 0 : i32
    return %c0_i32, %arg0 : i32, i32
  }
  func.func @transform_1(%arg0: i32) -> (i32, i32) {
    %c0_i32 = arith.constant 0 : i32
    %c0_i32_0 = arith.constant 0 : i32
    %c0_i32_1 = arith.constant 0 : i32
    return %c0_i32, %c0_i32_0 : i32, i32
  }
  func.func @transform_2(%arg0: i32) -> (i32, i32) {
    %c0_i32 = arith.constant 0 : i32
    %c0_i32_0 = arith.constant 0 : i32
    %c0_i32_1 = arith.constant 0 : i32
    return %c0_i32, %c0_i32_0 : i32, i32
  }
  func.func @transform_3(%arg0: i32) -> (i32, i32) {
    %c0_i32 = arith.constant 0 : i32
    %c0_i32_0 = arith.constant 0 : i32
    %c0_i32_1 = arith.constant 0 : i32
    return %c0_i32, %c0_i32_0 : i32, i32
  }
  func.func @transform_4(%arg0: i32) -> (i32, i32) {
    %c0_i32 = arith.constant 0 : i32
    %c0_i32_0 = arith.constant 0 : i32
    %c0_i32_1 = arith.constant 0 : i32
    return %c0_i32, %c0_i32_0 : i32, i32
  }
  func.func @transform_5(%arg0: i32) -> (i32, i32) {
    %c0_i32 = arith.constant 0 : i32
    %c0_i32_0 = arith.constant 0 : i32
    %c0_i32_1 = arith.constant 0 : i32
    return %c0_i32, %c0_i32_0 : i32, i32
  }
  func.func @transform_6(%arg0: i32) -> (i32, i32) {
    %c0_i32 = arith.constant 0 : i32
    %c0_i32_0 = arith.constant 0 : i32
    return %c0_i32, %arg0 : i32, i32
  }
}

</mosaic_0001>

<llo_original>
// kernel: tpu_custom_call.1
$region0: #{tpu_custom_call.1}
  #allocation0 [shape = 'u32[]', space=smem, size = 0x4, offset = 0x4, fixed_abs, tag = 'smem constant byte address 0x4 - core index']
  #allocation1 [shape = 'u32[144,128]{1,0:T(1,128)}', space=vmem, size = 0x12000, scoped, tag = 'internal scratch']
  %s0 = inlined_call_operand.vmem [shape: f32[4,1024], index: 0, kind: input, shape index: {}]
  %s1 = inlined_call_operand.vmem [shape: f32[32,3], index: 1, kind: input, shape index: {}]
  %s2 = inlined_call_operand.vmem [shape: f32[32,1], index: 2, kind: input, shape index: {}]
  %s3 = inlined_call_operand.vmem [shape: f32[32,1], index: 3, kind: input, shape index: {}]
  %s4 = inlined_call_operand.vmem [shape: f32[32,3], index: 4, kind: input, shape index: {}]
  %s5 = inlined_call_operand.vmem [shape: f32[3,1], index: 5, kind: input, shape index: {}]
  %s6 = inlined_call_operand.hbm [shape: f32[3,1024], index: 6, kind: output, shape index: {}]
  %s7 = sld [smem:[#allocation0]]
  $region34: #{tpu_custom_call.1} parent=0
    _
  %s9 = ssub.s32 1, %s7
  %s10 = scalar_select 0, %s9, %s7
  $region1: #{tpu_custom_call.1} parent=0
    #allocation2 [shape = 'u8[16384]{0}', space=vmem, size = 0x4000, scoped, tag = 'output window, operand 0, single buffered']
    #allocation3 [shape = 's32[1]{0}', space=sflag, size = 0x4, scoped, tag = 'scoped memory for tpu_custom_call.1']
    %11 = vsyncpa [#allocation3], 0
    // Predicated region
    $region2: #{tpu_custom_call.1} parent=1 // pred_check
      _
    $region3: #{tpu_custom_call.1} parent=1 // pred_check_branch
      %13 = sbr.rel (0) target = $region5
    $region4: #{tpu_custom_call.1} parent=1 // pred_region
      _
    $region5: #{tpu_custom_call.1} parent=1 // pred_fallthru
      _
    // Predicated region
    $region6: #{tpu_custom_call.1} parent=1 // pred_check
      _
    $region7: #{tpu_custom_call.1} parent=1 // pred_check_branch
      %15 = sbr.rel (0) target = $region9
    $region8: #{tpu_custom_call.1} parent=1 // pred_region
      _
    $region9: #{tpu_custom_call.1} parent=1 // pred_fallthru
      _
    // Predicated region
    $region10: #{tpu_custom_call.1} parent=1 // pred_check
      _
    $region11: #{tpu_custom_call.1} parent=1 // pred_check_branch
      %17 = sbr.rel (0) target = $region13
    $region12: #{tpu_custom_call.1} parent=1 // pred_region
      _
    $region13: #{tpu_custom_call.1} parent=1 // pred_fallthru
      _
    // Predicated region
    $region14: #{tpu_custom_call.1} parent=1 // pred_check
      _
    $region15: #{tpu_custom_call.1} parent=1 // pred_check_branch
      %19 = sbr.rel (0) target = $region17
    $region16: #{tpu_custom_call.1} parent=1 // pred_region
      _
    $region17: #{tpu_custom_call.1} parent=1 // pred_fallthru
      _
    // Predicated region
    $region18: #{tpu_custom_call.1} parent=1 // pred_check
      _
    $region19: #{tpu_custom_call.1} parent=1 // pred_check_branch
      %21 = sbr.rel (0) target = $region21
    $region20: #{tpu_custom_call.1} parent=1 // pred_region
      _
    $region21: #{tpu_custom_call.1} parent=1 // pred_fallthru
      _
    // Predicated region
    $region22: #{tpu_custom_call.1} parent=1 // pred_check
      _
    $region23: #{tpu_custom_call.1} parent=1 // pred_check_branch
      %23 = sbr.rel (0) target = $region25
    $region24: #{tpu_custom_call.1} parent=1 // pred_region
      _
    $region25: #{tpu_custom_call.1} parent=1 // pred_fallthru
      _
    %v24 = vld [vmem:[%s1] sm:$0xff]
    %v25 = vld [vmem:[%s1 + $0x8] sm:$0xff]
    %v26 = vld [vmem:[%s1 + $0x10] sm:$0xff]
    %v27 = vld [vmem:[%s1 + $0x18] sm:$0xff]
    %v28 = vld [vmem:[%s2] sm:$0xff]
    %v29 = vld [vmem:[%s2 + $0x8] sm:$0xff]
    %v30 = vld [vmem:[%s2 + $0x10] sm:$0xff]
    %v31 = vld [vmem:[%s2 + $0x18] sm:$0xff]
    %v32 = vld [vmem:[%s3] sm:$0xff]
    %v33 = vld [vmem:[%s3 + $0x8] sm:$0xff]
    %v34 = vld [vmem:[%s3 + $0x10] sm:$0xff]
    %v35 = vld [vmem:[%s3 + $0x18] sm:$0xff]
    %v36 = vld [vmem:[%s4] sm:$0xff]
    %v37 = vld [vmem:[%s4 + $0x8] sm:$0xff]
    %v38 = vld [vmem:[%s4 + $0x10] sm:$0xff]
    %v39 = vld [vmem:[%s4 + $0x18] sm:$0xff]
    %v40 = vld [vmem:[%s5] sm:$0x7]
    %v41 = vld [vmem:[%s0] sm:$0xff]
    %v42 = vld [vmem:[%s0 + $0x8] sm:$0xff]
    %v43 = vmul.f32 %v41, %v41
    %v44 = vmul.f32 %v42, %v42
    %v45 = vadd.f32 %v43, 1.0
    %v46 = vadd.f32 %v44, 1.0
    %v47 = vrsqrt.pop %v45
    %v48 = vrsqrt.pop %v46
    %v51 = vlaneseq
    %v52 = vshrl.u32 %v51, 7
    %v53 = vsub.s32 3, %v52
    %v54 = vrot.slane %v47, %v53
    %v55 = vlaneseq
    %v56 = vshrl.u32 %v55, 7
    %v57 = vsub.s32 7, %v56
    %v58 = vrot.slane %v47, %v57
    %v59 = vlaneseq
    %v60 = vshrl.u32 %v59, 7
    %v61 = vsub.s32 3, %v60
    %v62 = vrot.slane %v48, %v61
    %v63 = vlaneseq
    %v64 = vshrl.u32 %v63, 7
    %v65 = vsub.s32 7, %v64
    %v66 = vrot.slane %v48, %v65
    %v71 = vlaneseq
    %v72 = vshrl.u32 %v71, 7
    %v73 = vsub.s32 3, %v72
    %v74 = vrot.slane %v54, %v73
    %v75 = vlaneseq
    %v76 = vshrl.u32 %v75, 7
    %v77 = vsub.s32 3, %v76
    %v78 = vrot.slane %v58, %v77
    %v79 = vlaneseq
    %v80 = vshrl.u32 %v79, 7
    %v81 = vsub.s32 3, %v80
    %v82 = vrot.slane %v62, %v81
    %v83 = vlaneseq
    %v84 = vshrl.u32 %v83, 7
    %v85 = vsub.s32 3, %v84
    %v86 = vrot.slane %v66, %v85
    %v89 = vcombine.high %v41, %v41
    %v90 = vcombine.high %v42, %v42
    %v93 = vmul.f32 %v74, %v41
    %v94 = vmul.f32 %v78, %v89
    %v95 = vmul.f32 %v82, %v42
    %v96 = vmul.f32 %v86, %v90
    %v97 = vmul.f32 %v41, %v47
    %v98 = vmul.f32 %v42, %v48
    %v99 = vlog2.pop %v41
    %v100 = vmul.f32 %v99, 0.6931472
    %v101 = vlog2.pop %v42
    %v102 = vmul.f32 %v101, 0.6931472
    %v103 = vmul.f32 %v100, 0.25
    %v104 = vmul.f32 %v102, 0.25
    %106 = vset.pattern.permute.xlu0 0
    %107 = vperm.xlu0 %106, %v32
    %v108 = vpop.permute.xlu0 %107
    %111 = vset.pattern.permute.xlu0 0
    %112 = vperm.xlu0 %111, %v33
    %v113 = vpop.permute.xlu0 %112
    %116 = vset.pattern.permute.xlu0 0
    %117 = vperm.xlu0 %116, %v34
    %v118 = vpop.permute.xlu0 %117
    %121 = vset.pattern.permute.xlu0 0
    %122 = vperm.xlu0 %121, %v35
    %v123 = vpop.permute.xlu0 %122
    %v127 = vlaneseq
    %v128 = vshrl.u32 %v127, 7
    %v129 = vsub.s32 3, %v128
    %v130 = vrot.slane %v103, %v129
    %v131 = vlaneseq
    %v132 = vshrl.u32 %v131, 7
    %v133 = vsub.s32 7, %v132
    %v134 = vrot.slane %v103, %v133
    %v135 = vlaneseq
    %v136 = vshrl.u32 %v135, 7
    %v137 = vsub.s32 3, %v136
    %v138 = vrot.slane %v104, %v137
    %v139 = vlaneseq
    %v140 = vshrl.u32 %v139, 7
    %v141 = vsub.s32 7, %v140
    %v142 = vrot.slane %v104, %v141
    %v147 = vlaneseq
    %v148 = vshrl.u32 %v147, 7
    %v149 = vsub.s32 3, %v148
    %v150 = vrot.slane %v130, %v149
    %v151 = vlaneseq
    %v152 = vshrl.u32 %v151, 7
    %v153 = vsub.s32 3, %v152
    %v154 = vrot.slane %v134, %v153
    %v155 = vlaneseq
    %v156 = vshrl.u32 %v155, 7
    %v157 = vsub.s32 3, %v156
    %v158 = vrot.slane %v138, %v157
    %v159 = vlaneseq
    %v160 = vshrl.u32 %v159, 7
    %v161 = vsub.s32 3, %v160
    %v162 = vrot.slane %v142, %v161
    %v163 = vmul.f32 %v108, %v150
    %v164 = vmul.f32 %v108, %v154
    %v165 = vmul.f32 %v108, %v158
    %v166 = vmul.f32 %v108, %v162
    %v167 = vmul.f32 %v113, %v150
    %v168 = vmul.f32 %v113, %v154
    %v169 = vmul.f32 %v113, %v158
    %v170 = vmul.f32 %v113, %v162
    %v171 = vmul.f32 %v118, %v150
    %v172 = vmul.f32 %v118, %v154
    %v173 = vmul.f32 %v118, %v158
    %v174 = vmul.f32 %v118, %v162
    %v175 = vmul.f32 %v123, %v150
    %v176 = vmul.f32 %v123, %v154
    %v177 = vmul.f32 %v123, %v158
    %v178 = vmul.f32 %v123, %v162
    %180 = vset.pattern.permute.xlu0 0
    %181 = vperm.xlu0 %180, %v28
    %v182 = vpop.permute.xlu0 %181
    %185 = vset.pattern.permute.xlu0 0
    %186 = vperm.xlu0 %185, %v29
    %v187 = vpop.permute.xlu0 %186
    %190 = vset.pattern.permute.xlu0 0
    %191 = vperm.xlu0 %190, %v30
    %v192 = vpop.permute.xlu0 %191
    %195 = vset.pattern.permute.xlu0 0
    %196 = vperm.xlu0 %195, %v31
    %v197 = vpop.permute.xlu0 %196
    %v199 = vadd.f32 %v182, %v163
    %v200 = vadd.f32 %v182, %v164
    %v201 = vadd.f32 %v182, %v165
    %v202 = vadd.f32 %v182, %v166
    %v203 = vadd.f32 %v187, %v167
    %v204 = vadd.f32 %v187, %v168
    %v205 = vadd.f32 %v187, %v169
    %v206 = vadd.f32 %v187, %v170
    %v207 = vadd.f32 %v192, %v171
    %v208 = vadd.f32 %v192, %v172
    %v209 = vadd.f32 %v192, %v173
    %v210 = vadd.f32 %v192, %v174
    %v211 = vadd.f32 %v197, %v175
    %v212 = vadd.f32 %v197, %v176
    %v213 = vadd.f32 %v197, %v177
    %v214 = vadd.f32 %v197, %v178
    %216 = vset.pattern.permute.xlu0 0
    %217 = vperm.xlu0 %216, %v24
    %v218 = vpop.permute.xlu0 %217
    %221 = vset.pattern.permute.xlu0 0
    %222 = vperm.xlu0 %221, %v25
    %v223 = vpop.permute.xlu0 %222
    %226 = vset.pattern.permute.xlu0 0
    %227 = vperm.xlu0 %226, %v26
    %v228 = vpop.permute.xlu0 %227
    %231 = vset.pattern.permute.xlu0 0
    %232 = vperm.xlu0 %231, %v27
    %v233 = vpop.permute.xlu0 %232
    %v235 = vlaneseq
    %v236 = vshrl.u32 %v235, 7
    %v237 = vsub.s32 0, %v236
    %v238 = vrot.slane %v93, %v237
    %v239 = vlaneseq
    %v240 = vshrl.u32 %v239, 7
    %v241 = vsub.s32 0, %v240
    %v242 = vrot.slane %v94, %v241
    %v243 = vlaneseq
    %v244 = vshrl.u32 %v243, 7
    %v245 = vsub.s32 0, %v244
    %v246 = vrot.slane %v95, %v245
    %v247 = vlaneseq
    %v248 = vshrl.u32 %v247, 7
    %v249 = vsub.s32 0, %v248
    %v250 = vrot.slane %v96, %v249
    %v251 = vmul.f32 %v218, %v238
    %v252 = vmul.f32 %v218, %v242
    %v253 = vmul.f32 %v218, %v246
    %v254 = vmul.f32 %v218, %v250
    %v255 = vmul.f32 %v223, %v238
    %v256 = vmul.f32 %v223, %v242
    %v257 = vmul.f32 %v223, %v246
    %v258 = vmul.f32 %v223, %v250
    %v259 = vmul.f32 %v228, %v238
    %v260 = vmul.f32 %v228, %v242
    %v261 = vmul.f32 %v228, %v246
    %v262 = vmul.f32 %v228, %v250
    %v263 = vmul.f32 %v233, %v238
    %v264 = vmul.f32 %v233, %v242
    %v265 = vmul.f32 %v233, %v246
    %v266 = vmul.f32 %v233, %v250
    %v267 = vadd.f32 %v199, %v251
    %v268 = vadd.f32 %v200, %v252
    %v269 = vadd.f32 %v201, %v253
    %v270 = vadd.f32 %v202, %v254
    %v271 = vadd.f32 %v203, %v255
    %v272 = vadd.f32 %v204, %v256
    %v273 = vadd.f32 %v205, %v257
    %v274 = vadd.f32 %v206, %v258
    %v275 = vadd.f32 %v207, %v259
    %v276 = vadd.f32 %v208, %v260
    %v277 = vadd.f32 %v209, %v261
    %v278 = vadd.f32 %v210, %v262
    %v279 = vadd.f32 %v211, %v263
    %v280 = vadd.f32 %v212, %v264
    %v281 = vadd.f32 %v213, %v265
    %v282 = vadd.f32 %v214, %v266
    %283 = vset.pattern.permute.xlu0 1
    %284 = vperm.xlu0 %283, %v24
    %v285 = vpop.permute.xlu0 %284
    %287 = vset.pattern.permute.xlu0 1
    %288 = vperm.xlu0 %287, %v25
    %v289 = vpop.permute.xlu0 %288
    %291 = vset.pattern.permute.xlu0 1
    %292 = vperm.xlu0 %291, %v26
    %v293 = vpop.permute.xlu0 %292
    %295 = vset.pattern.permute.xlu0 1
    %296 = vperm.xlu0 %295, %v27
    %v297 = vpop.permute.xlu0 %296
    %v299 = vlaneseq
    %v300 = vshrl.u32 %v299, 7
    %v301 = vsub.s32 1, %v300
    %v302 = vrot.slane %v93, %v301
    %v303 = vlaneseq
    %v304 = vshrl.u32 %v303, 7
    %v305 = vsub.s32 1, %v304
    %v306 = vrot.slane %v94, %v305
    %v307 = vlaneseq
    %v308 = vshrl.u32 %v307, 7
    %v309 = vsub.s32 1, %v308
    %v310 = vrot.slane %v95, %v309
    %v311 = vlaneseq
    %v312 = vshrl.u32 %v311, 7
    %v313 = vsub.s32 1, %v312
    %v314 = vrot.slane %v96, %v313
    %v315 = vmul.f32 %v285, %v302
    %v316 = vmul.f32 %v285, %v306
    %v317 = vmul.f32 %v285, %v310
    %v318 = vmul.f32 %v285, %v314
    %v319 = vmul.f32 %v289, %v302
    %v320 = vmul.f32 %v289, %v306
    %v321 = vmul.f32 %v289, %v310
    %v322 = vmul.f32 %v289, %v314
    %v323 = vmul.f32 %v293, %v302
    %v324 = vmul.f32 %v293, %v306
    %v325 = vmul.f32 %v293, %v310
    %v326 = vmul.f32 %v293, %v314
    %v327 = vmul.f32 %v297, %v302
    %v328 = vmul.f32 %v297, %v306
    %v329 = vmul.f32 %v297, %v310
    %v330 = vmul.f32 %v297, %v314
    %v331 = vadd.f32 %v267, %v315
    %v332 = vadd.f32 %v268, %v316
    %v333 = vadd.f32 %v269, %v317
    %v334 = vadd.f32 %v270, %v318
    %v335 = vadd.f32 %v271, %v319
    %v336 = vadd.f32 %v272, %v320
    %v337 = vadd.f32 %v273, %v321
    %v338 = vadd.f32 %v274, %v322
    %v339 = vadd.f32 %v275, %v323
    %v340 = vadd.f32 %v276, %v324
    %v341 = vadd.f32 %v277, %v325
    %v342 = vadd.f32 %v278, %v326
    %v343 = vadd.f32 %v279, %v327
    %v344 = vadd.f32 %v280, %v328
    %v345 = vadd.f32 %v281, %v329
    %v346 = vadd.f32 %v282, %v330
    %347 = vset.pattern.permute.xlu0 2
    %348 = vperm.xlu0 %347, %v24
    %v349 = vpop.permute.xlu0 %348
    %351 = vset.pattern.permute.xlu0 2
    %352 = vperm.xlu0 %351, %v25
    %v353 = vpop.permute.xlu0 %352
    %355 = vset.pattern.permute.xlu0 2
    %356 = vperm.xlu0 %355, %v26
    %v357 = vpop.permute.xlu0 %356
    %359 = vset.pattern.permute.xlu0 2
    %360 = vperm.xlu0 %359, %v27
    %v361 = vpop.permute.xlu0 %360
    %v363 = vlaneseq
    %v364 = vshrl.u32 %v363, 7
    %v365 = vsub.s32 2, %v364
    %v366 = vrot.slane %v93, %v365
    %v367 = vlaneseq
    %v368 = vshrl.u32 %v367, 7
    %v369 = vsub.s32 2, %v368
    %v370 = vrot.slane %v94, %v369
    %v371 = vlaneseq
    %v372 = vshrl.u32 %v371, 7
    %v373 = vsub.s32 2, %v372
    %v374 = vrot.slane %v95, %v373
    %v375 = vlaneseq
    %v376 = vshrl.u32 %v375, 7
    %v377 = vsub.s32 2, %v376
    %v378 = vrot.slane %v96, %v377
    %v379 = vmul.f32 %v349, %v366
    %v380 = vmul.f32 %v349, %v370
    %v381 = vmul.f32 %v349, %v374
    %v382 = vmul.f32 %v349, %v378
    %v383 = vmul.f32 %v353, %v366
    %v384 = vmul.f32 %v353, %v370
    %v385 = vmul.f32 %v353, %v374
    %v386 = vmul.f32 %v353, %v378
    %v387 = vmul.f32 %v357, %v366
    %v388 = vmul.f32 %v357, %v370
    %v389 = vmul.f32 %v357, %v374
    %v390 = vmul.f32 %v357, %v378
    %v391 = vmul.f32 %v361, %v366
    %v392 = vmul.f32 %v361, %v370
    %v393 = vmul.f32 %v361, %v374
    %v394 = vmul.f32 %v361, %v378
    %v395 = vadd.f32 %v331, %v379
    %v396 = vadd.f32 %v332, %v380
    %v397 = vadd.f32 %v333, %v381
    %v398 = vadd.f32 %v334, %v382
    %v399 = vadd.f32 %v335, %v383
    %v400 = vadd.f32 %v336, %v384
    %v401 = vadd.f32 %v337, %v385
    %v402 = vadd.f32 %v338, %v386
    %v403 = vadd.f32 %v339, %v387
    %v404 = vadd.f32 %v340, %v388
    %v405 = vadd.f32 %v341, %v389
    %v406 = vadd.f32 %v342, %v390
    %v407 = vadd.f32 %v343, %v391
    %v408 = vadd.f32 %v344, %v392
    %v409 = vadd.f32 %v345, %v393
    %v410 = vadd.f32 %v346, %v394
    %v411 = vmul.f32 %v395, %v395
    %v412 = vmul.f32 %v396, %v396
    %v413 = vmul.f32 %v397, %v397
    %v414 = vmul.f32 %v398, %v398
    %v415 = vmul.f32 %v399, %v399
    %v416 = vmul.f32 %v400, %v400
    %v417 = vmul.f32 %v401, %v401
    %v418 = vmul.f32 %v402, %v402
    %v419 = vmul.f32 %v403, %v403
    %v420 = vmul.f32 %v404, %v404
    %v421 = vmul.f32 %v405, %v405
    %v422 = vmul.f32 %v406, %v406
    %v423 = vmul.f32 %v407, %v407
    %v424 = vmul.f32 %v408, %v408
    %v425 = vmul.f32 %v409, %v409
    %v426 = vmul.f32 %v410, %v410
    %v427 = vmul.f32 %v395, %v411
    %v428 = vmul.f32 %v396, %v412
    %v429 = vmul.f32 %v397, %v413
    %v430 = vmul.f32 %v398, %v414
    %v431 = vmul.f32 %v399, %v415
    %v432 = vmul.f32 %v400, %v416
    %v433 = vmul.f32 %v401, %v417
    %v434 = vmul.f32 %v402, %v418
    %v435 = vmul.f32 %v403, %v419
    %v436 = vmul.f32 %v404, %v420
    %v437 = vmul.f32 %v405, %v421
    %v438 = vmul.f32 %v406, %v422
    %v439 = vmul.f32 %v407, %v423
    %v440 = vmul.f32 %v408, %v424
    %v441 = vmul.f32 %v409, %v425
    %v442 = vmul.f32 %v410, %v426
    %v443 = vmul.f32 %v427, 0.044715
    %v444 = vmul.f32 %v428, 0.044715
    %v445 = vmul.f32 %v429, 0.044715
    %v446 = vmul.f32 %v430, 0.044715
    %v447 = vmul.f32 %v431, 0.044715
    %v448 = vmul.f32 %v432, 0.044715
    %v449 = vmul.f32 %v433, 0.044715
    %v450 = vmul.f32 %v434, 0.044715
    %v451 = vmul.f32 %v435, 0.044715
    %v452 = vmul.f32 %v436, 0.044715
    %v453 = vmul.f32 %v437, 0.044715
    %v454 = vmul.f32 %v438, 0.044715
    %v455 = vmul.f32 %v439, 0.044715
    %v456 = vmul.f32 %v440, 0.044715
    %v457 = vmul.f32 %v441, 0.044715
    %v458 = vmul.f32 %v442, 0.044715
    %v459 = vadd.f32 %v395, %v443
    %v460 = vadd.f32 %v396, %v444
    %v461 = vadd.f32 %v397, %v445
    %v462 = vadd.f32 %v398, %v446
    %v463 = vadd.f32 %v399, %v447
    %v464 = vadd.f32 %v400, %v448
    %v465 = vadd.f32 %v401, %v449
    %v466 = vadd.f32 %v402, %v450
    %v467 = vadd.f32 %v403, %v451
    %v468 = vadd.f32 %v404, %v452
    %v469 = vadd.f32 %v405, %v453
    %v470 = vadd.f32 %v406, %v454
    %v471 = vadd.f32 %v407, %v455
    %v472 = vadd.f32 %v408, %v456
    %v473 = vadd.f32 %v409, %v457
    %v474 = vadd.f32 %v410, %v458
    %v475 = vmul.f32 %v459, 0.7978846
    %v476 = vmul.f32 %v460, 0.7978846
    %v477 = vmul.f32 %v461, 0.7978846
    %v478 = vmul.f32 %v462, 0.7978846
    %v479 = vmul.f32 %v463, 0.7978846
    %v480 = vmul.f32 %v464, 0.7978846
    %v481 = vmul.f32 %v465, 0.7978846
    %v482 = vmul.f32 %v466, 0.7978846
    %v483 = vmul.f32 %v467, 0.7978846
    %v484 = vmul.f32 %v468, 0.7978846
    %v485 = vmul.f32 %v469, 0.7978846
    %v486 = vmul.f32 %v470, 0.7978846
    %v487 = vmul.f32 %v471, 0.7978846
    %v488 = vmul.f32 %v472, 0.7978846
    %v489 = vmul.f32 %v473, 0.7978846
    %v490 = vmul.f32 %v474, 0.7978846
    %v491 = vtanh.pop %v475
    %v492 = vtanh.pop %v476
    %v493 = vtanh.pop %v477
    %v494 = vtanh.pop %v478
    %v495 = vtanh.pop %v479
    %v496 = vtanh.pop %v480
    %v497 = vtanh.pop %v481
    %v498 = vtanh.pop %v482
    %v499 = vtanh.pop %v483
    %v500 = vtanh.pop %v484
    %v501 = vtanh.pop %v485
    %v502 = vtanh.pop %v486
    %v503 = vtanh.pop %v487
    %v504 = vtanh.pop %v488
    %v505 = vtanh.pop %v489
    %v506 = vtanh.pop %v490
    %v507 = vadd.f32 %v491, 1.0
    %v508 = vadd.f32 %v492, 1.0
    %v509 = vadd.f32 %v493, 1.0
    %v510 = vadd.f32 %v494, 1.0
    %v511 = vadd.f32 %v495, 1.0
    %v512 = vadd.f32 %v496, 1.0
    %v513 = vadd.f32 %v497, 1.0
    %v514 = vadd.f32 %v498, 1.0
    %v515 = vadd.f32 %v499, 1.0
    %v516 = vadd.f32 %v500, 1.0
    %v517 = vadd.f32 %v501, 1.0
    %v518 = vadd.f32 %v502, 1.0
    %v519 = vadd.f32 %v503, 1.0
    %v520 = vadd.f32 %v504, 1.0
    %v521 = vadd.f32 %v505, 1.0
    %v522 = vadd.f32 %v506, 1.0
    %v523 = vmul.f32 %v507, 0.5
    %v524 = vmul.f32 %v508, 0.5
    %v525 = vmul.f32 %v509, 0.5
    %v526 = vmul.f32 %v510, 0.5
    %v527 = vmul.f32 %v511, 0.5
    %v528 = vmul.f32 %v512, 0.5
    %v529 = vmul.f32 %v513, 0.5
    %v530 = vmul.f32 %v514, 0.5
    %v531 = vmul.f32 %v515, 0.5
    %v532 = vmul.f32 %v516, 0.5
    %v533 = vmul.f32 %v517, 0.5
    %v534 = vmul.f32 %v518, 0.5
    %v535 = vmul.f32 %v519, 0.5
    %v536 = vmul.f32 %v520, 0.5
    %v537 = vmul.f32 %v521, 0.5
    %v538 = vmul.f32 %v522, 0.5
    %v539 = vmul.f32 %v395, %v523
    %v540 = vmul.f32 %v396, %v524
    %v541 = vmul.f32 %v397, %v525
    %v542 = vmul.f32 %v398, %v526
    %v543 = vmul.f32 %v399, %v527
    %v544 = vmul.f32 %v400, %v528
    %v545 = vmul.f32 %v401, %v529
    %v546 = vmul.f32 %v402, %v530
    %v547 = vmul.f32 %v403, %v531
    %v548 = vmul.f32 %v404, %v532
    %v549 = vmul.f32 %v405, %v533
    %v550 = vmul.f32 %v406, %v534
    %v551 = vmul.f32 %v407, %v535
    %v552 = vmul.f32 %v408, %v536
    %v553 = vmul.f32 %v409, %v537
    %v554 = vmul.f32 %v410, %v538
    %v555 = vmul.f32 %v74, %v93
    %v556 = vmul.f32 %v78, %v94
    %v557 = vmul.f32 %v82, %v95
    %v558 = vmul.f32 %v86, %v96
    %560 = vset.pattern.permute.xlu0 0
    %561 = vperm.xlu0 %560, %v36
    %v562 = vpop.permute.xlu0 %561
    %565 = vset.pattern.permute.xlu0 0
    %566 = vperm.xlu0 %565, %v37
    %v567 = vpop.permute.xlu0 %566
    %570 = vset.pattern.permute.xlu0 0
    %571 = vperm.xlu0 %570, %v38
    %v572 = vpop.permute.xlu0 %571
    %575 = vset.pattern.permute.xlu0 0
    %576 = vperm.xlu0 %575, %v39
    %v577 = vpop.permute.xlu0 %576
    %v579 = vmul.f32 %v562, %v539
    %v580 = vmul.f32 %v562, %v540
    %v581 = vmul.f32 %v562, %v541
    %v582 = vmul.f32 %v562, %v542
    %v583 = vmul.f32 %v567, %v543
    %v584 = vmul.f32 %v567, %v544
    %v585 = vmul.f32 %v567, %v545
    %v586 = vmul.f32 %v567, %v546
    %v587 = vmul.f32 %v572, %v547
    %v588 = vmul.f32 %v572, %v548
    %v589 = vmul.f32 %v572, %v549
    %v590 = vmul.f32 %v572, %v550
    %v591 = vmul.f32 %v577, %v551
    %v592 = vmul.f32 %v577, %v552
    %v593 = vmul.f32 %v577, %v553
    %v594 = vmul.f32 %v577, %v554
    %v595 = vadd.f32 %v579, %v583
    %v596 = vadd.f32 %v595, %v587
    %v597 = vadd.f32 %v596, %v591
    %v598 = vrot.slane %v597, 4
    %v599 = vadd.f32 %v597, %v598
    %v600 = vrot.slane %v599, 2
    %v601 = vadd.f32 %v599, %v600
    %v602 = vrot.slane %v601, 1
    %v603 = vadd.f32 %v601, %v602
    %v604 = vadd.f32 %v580, %v584
    %v605 = vadd.f32 %v604, %v588
    %v606 = vadd.f32 %v605, %v592
    %v607 = vrot.slane %v606, 4
    %v608 = vadd.f32 %v606, %v607
    %v609 = vrot.slane %v608, 2
    %v610 = vadd.f32 %v608, %v609
    %v611 = vrot.slane %v610, 1
    %v612 = vadd.f32 %v610, %v611
    %v613 = vadd.f32 %v581, %v585
    %v614 = vadd.f32 %v613, %v589
    %v615 = vadd.f32 %v614, %v593
    %v616 = vrot.slane %v615, 4
    %v617 = vadd.f32 %v615, %v616
    %v618 = vrot.slane %v617, 2
    %v619 = vadd.f32 %v617, %v618
    %v620 = vrot.slane %v619, 1
    %v621 = vadd.f32 %v619, %v620
    %v622 = vadd.f32 %v582, %v586
    %v623 = vadd.f32 %v622, %v590
    %v624 = vadd.f32 %v623, %v594
    %v625 = vrot.slane %v624, 4
    %v626 = vadd.f32 %v624, %v625
    %v627 = vrot.slane %v626, 2
    %v628 = vadd.f32 %v626, %v627
    %v629 = vrot.slane %v628, 1
    %v630 = vadd.f32 %v628, %v629
    %632 = vset.pattern.permute.xlu0 0
    %633 = vperm.xlu0 %632, %v40
    %v634 = vpop.permute.xlu0 %633
    %v636 = vadd.f32 %v603, %v634
    %v637 = vadd.f32 %v612, %v634
    %v638 = vadd.f32 %v621, %v634
    %v639 = vadd.f32 %v630, %v634
    %v644 = vcombine.low %v636, %v637
    %v645 = vcombine.low %v638, %v639
    %v646 = vrot.slane %v644, 5
    %v647 = vrot.slane %v645, 5
    %v650 = vmul.f32 %v97, %v646
    %v651 = vmul.f32 %v98, %v647
    %v654 = vlaneseq
    %v655 = vshrl.u32 %v654, 7
    %v656 = vsub.s32 3, %v655
    %v657 = vrot.slane %v650, %v656
    %v658 = vlaneseq
    %v659 = vshrl.u32 %v658, 7
    %v660 = vsub.s32 7, %v659
    %v661 = vrot.slane %v650, %v660
    %v662 = vlaneseq
    %v663 = vshrl.u32 %v662, 7
    %v664 = vsub.s32 3, %v663
    %v665 = vrot.slane %v651, %v664
    %v666 = vlaneseq
    %v667 = vshrl.u32 %v666, 7
    %v668 = vsub.s32 7, %v667
    %v669 = vrot.slane %v651, %v668
    %v674 = vadd.f32 %v555, %v657
    %v675 = vadd.f32 %v556, %v661
    %v676 = vadd.f32 %v557, %v665
    %v677 = vadd.f32 %v558, %v669
    %v682 = vcombine.low %v674, %v675
    %v683 = vcombine.low %v676, %v677
    %v685 = vunpack.c.l.s4 1966171168
    %v686 = vunpack.c.0.s8 %v685
    %v687 = vlaneseq
    %v688 = vshrl.u32 %v687, 7
    %v689 = vsub.s32 %v686, %v688
    %v690 = vrot.slane %v682, %v689
    %v692 = vunpack.c.l.s4 1966171168
    %v693 = vunpack.c.0.s8 %v692
    %v694 = vlaneseq
    %v695 = vshrl.u32 %v694, 7
    %v696 = vsub.s32 %v693, %v695
    %v697 = vrot.slane %v683, %v696
    %v698 = vcombine.low %v690, %v697
    %v700 = vunpack.c.l.s4 1966171168
    %v701 = vunpack.c.0.s8 %v700
    %v702 = vlaneseq
    %v703 = vshrl.u32 %v702, 7
    %v704 = vsub.s32 %v701, %v703
    %v705 = vrot.slane %v698, %v704
    %v707 = vlaneseq
    %vm708 = vcmp.ge.s32.totalorder %v707, 0
    %vm709 = vcmp.lt.s32.totalorder %v707, 512
    %vm710 = vmand %vm708, %vm709
    %711 = vst.msk [vmem:[#allocation2] ss:$4 sm:$0xf] %vm710, %v705
    %712 = vset.pattern.permute.xlu0 1
    %713 = vperm.xlu0 %712, %v36
    %v714 = vpop.permute.xlu0 %713
    %716 = vset.pattern.permute.xlu0 1
    %717 = vperm.xlu0 %716, %v37
    %v718 = vpop.permute.xlu0 %717
    %720 = vset.pattern.permute.xlu0 1
    %721 = vperm.xlu0 %720, %v38
    %v722 = vpop.permute.xlu0 %721
    %724 = vset.pattern.permute.xlu0 1
    %725 = vperm.xlu0 %724, %v39
    %v726 = vpop.permute.xlu0 %725
    %v728 = vmul.f32 %v714, %v539
    %v729 = vmul.f32 %v714, %v540
    %v730 = vmul.f32 %v714, %v541
    %v731 = vmul.f32 %v714, %v542
    %v732 = vmul.f32 %v718, %v543
    %v733 = vmul.f32 %v718, %v544
    %v734 = vmul.f32 %v718, %v545
    %v735 = vmul.f32 %v718, %v546
    %v736 = vmul.f32 %v722, %v547
    %v737 = vmul.f32 %v722, %v548
    %v738 = vmul.f32 %v722, %v549
    %v739 = vmul.f32 %v722, %v550
    %v740 = vmul.f32 %v726, %v551
    %v741 = vmul.f32 %v726, %v552
    %v742 = vmul.f32 %v726, %v553
    %v743 = vmul.f32 %v726, %v554
    %v744 = vadd.f32 %v728, %v732
    %v745 = vadd.f32 %v744, %v736
    %v746 = vadd.f32 %v745, %v740
    %v747 = vrot.slane %v746, 4
    %v748 = vadd.f32 %v746, %v747
    %v749 = vrot.slane %v748, 2
    %v750 = vadd.f32 %v748, %v749
    %v751 = vrot.slane %v750, 1
    %v752 = vadd.f32 %v750, %v751
    %v753 = vadd.f32 %v729, %v733
    %v754 = vadd.f32 %v753, %v737
    %v755 = vadd.f32 %v754, %v741
    %v756 = vrot.slane %v755, 4
    %v757 = vadd.f32 %v755, %v756
    %v758 = vrot.slane %v757, 2
    %v759 = vadd.f32 %v757, %v758
    %v760 = vrot.slane %v759, 1
    %v761 = vadd.f32 %v759, %v760
    %v762 = vadd.f32 %v730, %v734
    %v763 = vadd.f32 %v762, %v738
    %v764 = vadd.f32 %v763, %v742
    %v765 = vrot.slane %v764, 4
    %v766 = vadd.f32 %v764, %v765
    %v767 = vrot.slane %v766, 2
    %v768 = vadd.f32 %v766, %v767
    %v769 = vrot.slane %v768, 1
    %v770 = vadd.f32 %v768, %v769
    %v771 = vadd.f32 %v731, %v735
    %v772 = vadd.f32 %v771, %v739
    %v773 = vadd.f32 %v772, %v743
    %v774 = vrot.slane %v773, 4
    %v775 = vadd.f32 %v773, %v774
    %v776 = vrot.slane %v775, 2
    %v777 = vadd.f32 %v775, %v776
    %v778 = vrot.slane %v777, 1
    %v779 = vadd.f32 %v777, %v778
    %v780 = vadd.f32 %v752, %v634
    %v781 = vadd.f32 %v761, %v634
    %v782 = vadd.f32 %v770, %v634
    %v783 = vadd.f32 %v779, %v634
    %v788 = vcombine.low %v780, %v781
    %v789 = vcombine.low %v782, %v783
    %v790 = vrot.slane %v788, 6
    %v791 = vrot.slane %v789, 6
    %v794 = vmul.f32 %v97, %v790
    %v795 = vmul.f32 %v98, %v791
    %v798 = vlaneseq
    %v799 = vshrl.u32 %v798, 7
    %v800 = vsub.s32 3, %v799
    %v801 = vrot.slane %v794, %v800
    %v802 = vlaneseq
    %v803 = vshrl.u32 %v802, 7
    %v804 = vsub.s32 7, %v803
    %v805 = vrot.slane %v794, %v804
    %v806 = vlaneseq
    %v807 = vshrl.u32 %v806, 7
    %v808 = vsub.s32 3, %v807
    %v809 = vrot.slane %v795, %v808
    %v810 = vlaneseq
    %v811 = vshrl.u32 %v810, 7
    %v812 = vsub.s32 7, %v811
    %v813 = vrot.slane %v795, %v812
    %v818 = vadd.f32 %v555, %v801
    %v819 = vadd.f32 %v556, %v805
    %v820 = vadd.f32 %v557, %v809
    %v821 = vadd.f32 %v558, %v813
    %v826 = vcombine.low %v818, %v819
    %v827 = vcombine.low %v820, %v821
    %v829 = vunpack.c.l.s4 1966171168
    %v830 = vunpack.c.0.s8 %v829
    %v831 = vlaneseq
    %v832 = vshrl.u32 %v831, 7
    %v833 = vsub.s32 %v830, %v832
    %v834 = vrot.slane %v826, %v833
    %v836 = vunpack.c.l.s4 1966171168
    %v837 = vunpack.c.0.s8 %v836
    %v838 = vlaneseq
    %v839 = vshrl.u32 %v838, 7
    %v840 = vsub.s32 %v837, %v839
    %v841 = vrot.slane %v827, %v840
    %v842 = vcombine.high %v834, %v841
    %v844 = vunpack.c.l.s4 1966171168
    %v845 = vunpack.c.0.s8 %v844
    %v846 = vlaneseq
    %v847 = vshrl.u32 %v846, 7
    %v848 = vsub.s32 %v845, %v847
    %v849 = vrot.slane %v842, %v848
    %s851 = scalar_lea.vmem [#allocation2], 1
    %852 = vst.msk [vmem:[%s851] ss:$4 sm:$0xf] %vm710, %v849
    %853 = vset.pattern.permute.xlu0 2
    %854 = vperm.xlu0 %853, %v36
    %v855 = vpop.permute.xlu0 %854
    %857 = vset.pattern.permute.xlu0 2
    %858 = vperm.xlu0 %857, %v37
    %v859 = vpop.permute.xlu0 %858
    %861 = vset.pattern.permute.xlu0 2
    %862 = vperm.xlu0 %861, %v38
    %v863 = vpop.permute.xlu0 %862
    %865 = vset.pattern.permute.xlu0 2
    %866 = vperm.xlu0 %865, %v39
    %v867 = vpop.permute.xlu0 %866
    %v869 = vmul.f32 %v855, %v539
    %v870 = vmul.f32 %v855, %v540
    %v871 = vmul.f32 %v855, %v541
    %v872 = vmul.f32 %v855, %v542
    %v873 = vmul.f32 %v859, %v543
    %v874 = vmul.f32 %v859, %v544
    %v875 = vmul.f32 %v859, %v545
    %v876 = vmul.f32 %v859, %v546
    %v877 = vmul.f32 %v863, %v547
    %v878 = vmul.f32 %v863, %v548
    %v879 = vmul.f32 %v863, %v549
    %v880 = vmul.f32 %v863, %v550
    %v881 = vmul.f32 %v867, %v551
    %v882 = vmul.f32 %v867, %v552
    %v883 = vmul.f32 %v867, %v553
    %v884 = vmul.f32 %v867, %v554
    %v885 = vadd.f32 %v869, %v873
    %v886 = vadd.f32 %v885, %v877
    %v887 = vadd.f32 %v886, %v881
    %v888 = vrot.slane %v887, 4
    %v889 = vadd.f32 %v887, %v888
    %v890 = vrot.slane %v889, 2
    %v891 = vadd.f32 %v889, %v890
    %v892 = vrot.slane %v891, 1
    %v893 = vadd.f32 %v891, %v892
    %v894 = vadd.f32 %v870, %v874
    %v895 = vadd.f32 %v894, %v878
    %v896 = vadd.f32 %v895, %v882
    %v897 = vrot.slane %v896, 4
    %v898 = vadd.f32 %v896, %v897
    %v899 = vrot.slane %v898, 2
    %v900 = vadd.f32 %v898, %v899
    %v901 = vrot.slane %v900, 1
    %v902 = vadd.f32 %v900, %v901
    %v903 = vadd.f32 %v871, %v875
    %v904 = vadd.f32 %v903, %v879
    %v905 = vadd.f32 %v904, %v883
    %v906 = vrot.slane %v905, 4
    %v907 = vadd.f32 %v905, %v906
    %v908 = vrot.slane %v907, 2
    %v909 = vadd.f32 %v907, %v908
    %v910 = vrot.slane %v909, 1
    %v911 = vadd.f32 %v909, %v910
    %v912 = vadd.f32 %v872, %v876
    %v913 = vadd.f32 %v912, %v880
    %v914 = vadd.f32 %v913, %v884
    %v915 = vrot.slane %v914, 4
    %v916 = vadd.f32 %v914, %v915
    %v917 = vrot.slane %v916, 2
    %v918 = vadd.f32 %v916, %v917
    %v919 = vrot.slane %v918, 1
    %v920 = vadd.f32 %v918, %v919
    %v921 = vadd.f32 %v893, %v634
    %v922 = vadd.f32 %v902, %v634
    %v923 = vadd.f32 %v911, %v634
    %v924 = vadd.f32 %v920, %v634
    %v929 = vcombine.low %v921, %v922
    %v930 = vcombine.low %v923, %v924
    %v931 = vrot.slane %v929, 7
    %v932 = vrot.slane %v930, 7
    %v935 = vmul.f32 %v97, %v931
    %v936 = vmul.f32 %v98, %v932
    %v939 = vlaneseq
    %v940 = vshrl.u32 %v939, 7
    %v941 = vsub.s32 3, %v940
    %v942 = vrot.slane %v935, %v941
    %v943 = vlaneseq
    %v944 = vshrl.u32 %v943, 7
    %v945 = vsub.s32 7, %v944
    %v946 = vrot.slane %v935, %v945
    %v947 = vlaneseq
    %v948 = vshrl.u32 %v947, 7
    %v949 = vsub.s32 3, %v948
    %v950 = vrot.slane %v936, %v949
    %v951 = vlaneseq
    %v952 = vshrl.u32 %v951, 7
    %v953 = vsub.s32 7, %v952
    %v954 = vrot.slane %v936, %v953
    %v959 = vadd.f32 %v555, %v942
    %v960 = vadd.f32 %v556, %v946
    %v961 = vadd.f32 %v557, %v950
    %v962 = vadd.f32 %v558, %v954
    %v967 = vcombine.low %v959, %v960
    %v968 = vcombine.low %v961, %v962
    %v970 = vunpack.c.l.s4 1966171168
    %v971 = vunpack.c.0.s8 %v970
    %v972 = vlaneseq
    %v973 = vshrl.u32 %v972, 7
    %v974 = vsub.s32 %v971, %v973
    %v975 = vrot.slane %v967, %v974
    %v977 = vunpack.c.l.s4 1966171168
    %v978 = vunpack.c.0.s8 %v977
    %v979 = vlaneseq
    %v980 = vshrl.u32 %v979, 7
    %v981 = vsub.s32 %v978, %v980
    %v982 = vrot.slane %v968, %v981
    %v983 = vcombine.low %v975, %v982
    %v985 = vunpack.c.l.s4 1966171168
    %v986 = vunpack.c.0.s8 %v985
    %v987 = vlaneseq
    %v988 = vshrl.u32 %v987, 7
    %v989 = vsub.s32 %v986, %v988
    %v990 = vrot.slane %v983, %v989
    %v991 = vcombine.high %v990, %v990
    %s993 = scalar_lea.vmem [#allocation2], 2
    %994 = vst.msk [vmem:[%s993] ss:$4 sm:$0xf] %vm710, %v991
    %v995 = vld [vmem:[%s0 + $0x10] sm:$0xff]
    %v996 = vld [vmem:[%s0 + $0x18] sm:$0xff]
    %v997 = vmul.f32 %v995, %v995
    %v998 = vmul.f32 %v996, %v996
    %v999 = vadd.f32 %v997, 1.0
    %v1000 = vadd.f32 %v998, 1.0
    %v1001 = vrsqrt.pop %v999
    %v1002 = vrsqrt.pop %v1000
    %v1005 = vlaneseq
    %v1006 = vshrl.u32 %v1005, 7
    %v1007 = vsub.s32 3, %v1006
    %v1008 = vrot.slane %v1001, %v1007
    %v1009 = vlaneseq
    %v1010 = vshrl.u32 %v1009, 7
    %v1011 = vsub.s32 7, %v1010
    %v1012 = vrot.slane %v1001, %v1011
    %v1013 = vlaneseq
    %v1014 = vshrl.u32 %v1013, 7
    %v1015 = vsub.s32 3, %v1014
    %v1016 = vrot.slane %v1002, %v1015
    %v1017 = vlaneseq
    %v1018 = vshrl.u32 %v1017, 7
    %v1019 = vsub.s32 7, %v1018
    %v1020 = vrot.slane %v1002, %v1019
    %v1025 = vlaneseq
    %v1026 = vshrl.u32 %v1025, 7
    %v1027 = vsub.s32 3, %v1026
    %v1028 = vrot.slane %v1008, %v1027
    %v1029 = vlaneseq
    %v1030 = vshrl.u32 %v1029, 7
    %v1031 = vsub.s32 3, %v1030
    %v1032 = vrot.slane %v1012, %v1031
    %v1033 = vlaneseq
    %v1034 = vshrl.u32 %v1033, 7
    %v1035 = vsub.s32 3, %v1034
    %v1036 = vrot.slane %v1016, %v1035
    %v1037 = vlaneseq
    %v1038 = vshrl.u32 %v1037, 7
    %v1039 = vsub.s32 3, %v1038
    %v1040 = vrot.slane %v1020, %v1039
    %v1043 = vcombine.high %v995, %v995
    %v1044 = vcombine.high %v996, %v996
    %v1047 = vmul.f32 %v1028, %v995
    %v1048 = vmul.f32 %v1032, %v1043
    %v1049 = vmul.f32 %v1036, %v996
    %v1050 = vmul.f32 %v1040, %v1044
    %v1051 = vmul.f32 %v995, %v1001
    %v1052 = vmul.f32 %v996, %v1002
    %v1053 = vlog2.pop %v995
    %v1054 = vmul.f32 %v1053, 0.6931472
    %v1055 = vlog2.pop %v996
    %v1056 = vmul.f32 %v1055, 0.6931472
    %v1057 = vmul.f32 %v1054, 0.25
    %v1058 = vmul.f32 %v1056, 0.25
    %v1061 = vlaneseq
    %v1062 = vshrl.u32 %v1061, 7
    %v1063 = vsub.s32 3, %v1062
    %v1064 = vrot.slane %v1057, %v1063
    %v1065 = vlaneseq
    %v1066 = vshrl.u32 %v1065, 7
    %v1067 = vsub.s32 7, %v1066
    %v1068 = vrot.slane %v1057, %v1067
    %v1069 = vlaneseq
    %v1070 = vshrl.u32 %v1069, 7
    %v1071 = vsub.s32 3, %v1070
    %v1072 = vrot.slane %v1058, %v1071
    %v1073 = vlaneseq
    %v1074 = vshrl.u32 %v1073, 7
    %v1075 = vsub.s32 7, %v1074
    %v1076 = vrot.slane %v1058, %v1075
    %v1081 = vlaneseq
    %v1082 = vshrl.u32 %v1081, 7
    %v1083 = vsub.s32 3, %v1082
    %v1084 = vrot.slane %v1064, %v1083
    %v1085 = vlaneseq
    %v1086 = vshrl.u32 %v1085, 7
    %v1087 = vsub.s32 3, %v1086
    %v1088 = vrot.slane %v1068, %v1087
    %v1089 = vlaneseq
    %v1090 = vshrl.u32 %v1089, 7
    %v1091 = vsub.s32 3, %v1090
    %v1092 = vrot.slane %v1072, %v1091
    %v1093 = vlaneseq
    %v1094 = vshrl.u32 %v1093, 7
    %v1095 = vsub.s32 3, %v1094
    %v1096 = vrot.slane %v1076, %v1095
    %v1097 = vmul.f32 %v108, %v1084
    %v1098 = vmul.f32 %v108, %v1088
    %v1099 = vmul.f32 %v108, %v1092
    %v1100 = vmul.f32 %v108, %v1096
    %v1101 = vmul.f32 %v113, %v1084
    %v1102 = vmul.f32 %v113, %v1088
    %v1103 = vmul.f32 %v113, %v1092
    %v1104 = vmul.f32 %v113, %v1096
    %v1105 = vmul.f32 %v118, %v1084
    %v1106 = vmul.f32 %v118, %v1088
    %v1107 = vmul.f32 %v118, %v1092
    %v1108 = vmul.f32 %v118, %v1096
    %v1109 = vmul.f32 %v123, %v1084
    %v1110 = vmul.f32 %v123, %v1088
    %v1111 = vmul.f32 %v123, %v1092
    %v1112 = vmul.f32 %v123, %v1096
    %v1113 = vadd.f32 %v182, %v1097
    %v1114 = vadd.f32 %v182, %v1098
    %v1115 = vadd.f32 %v182, %v1099
    %v1116 = vadd.f32 %v182, %v1100
    %v1117 = vadd.f32 %v187, %v1101
    %v1118 = vadd.f32 %v187, %v1102
    %v1119 = vadd.f32 %v187, %v1103
    %v1120 = vadd.f32 %v187, %v1104
    %v1121 = vadd.f32 %v192, %v1105
    %v1122 = vadd.f32 %v192, %v1106
    %v1123 = vadd.f32 %v192, %v1107
    %v1124 = vadd.f32 %v192, %v1108
    %v1125 = vadd.f32 %v197, %v1109
    %v1126 = vadd.f32 %v197, %v1110
    %v1127 = vadd.f32 %v197, %v1111
    %v1128 = vadd.f32 %v197, %v1112
    %v1129 = vlaneseq
    %v1130 = vshrl.u32 %v1129, 7
    %v1131 = vsub.s32 0, %v1130
    %v1132 = vrot.slane %v1047, %v1131
    %v1133 = vlaneseq
    %v1134 = vshrl.u32 %v1133, 7
    %v1135 = vsub.s32 0, %v1134
    %v1136 = vrot.slane %v1048, %v1135
    %v1137 = vlaneseq
    %v1138 = vshrl.u32 %v1137, 7
    %v1139 = vsub.s32 0, %v1138
    %v1140 = vrot.slane %v1049, %v1139
    %v1141 = vlaneseq
    %v1142 = vshrl.u32 %v1141, 7
    %v1143 = vsub.s32 0, %v1142
    %v1144 = vrot.slane %v1050, %v1143
    %v1145 = vmul.f32 %v218, %v1132
    %v1146 = vmul.f32 %v218, %v1136
    %v1147 = vmul.f32 %v218, %v1140
    %v1148 = vmul.f32 %v218, %v1144
    %v1149 = vmul.f32 %v223, %v1132
    %v1150 = vmul.f32 %v223, %v1136
    %v1151 = vmul.f32 %v223, %v1140
    %v1152 = vmul.f32 %v223, %v1144
    %v1153 = vmul.f32 %v228, %v1132
    %v1154 = vmul.f32 %v228, %v1136
    %v1155 = vmul.f32 %v228, %v1140
    %v1156 = vmul.f32 %v228, %v1144
    %v1157 = vmul.f32 %v233, %v1132
    %v1158 = vmul.f32 %v233, %v1136
    %v1159 = vmul.f32 %v233, %v1140
    %v1160 = vmul.f32 %v233, %v1144
    %v1161 = vadd.f32 %v1113, %v1145
    %v1162 = vadd.f32 %v1114, %v1146
    %v1163 = vadd.f32 %v1115, %v1147
    %v1164 = vadd.f32 %v1116, %v1148
    %v1165 = vadd.f32 %v1117, %v1149
    %v1166 = vadd.f32 %v1118, %v1150
    %v1167 = vadd.f32 %v1119, %v1151
    %v1168 = vadd.f32 %v1120, %v1152
    %v1169 = vadd.f32 %v1121, %v1153
    %v1170 = vadd.f32 %v1122, %v1154
    %v1171 = vadd.f32 %v1123, %v1155
    %v1172 = vadd.f32 %v1124, %v1156
    %v1173 = vadd.f32 %v1125, %v1157
    %v1174 = vadd.f32 %v1126, %v1158
    %v1175 = vadd.f32 %v1127, %v1159
    %v1176 = vadd.f32 %v1128, %v1160
    %v1177 = vlaneseq
    %v1178 = vshrl.u32 %v1177, 7
    %v1179 = vsub.s32 1, %v1178
    %v1180 = vrot.slane %v1047, %v1179
    %v1181 = vlaneseq
    %v1182 = vshrl.u32 %v1181, 7
    %v1183 = vsub.s32 1, %v1182
    %v1184 = vrot.slane %v1048, %v1183
    %v1185 = vlaneseq
    %v1186 = vshrl.u32 %v1185, 7
    %v1187 = vsub.s32 1, %v1186
    %v1188 = vrot.slane %v1049, %v1187
    %v1189 = vlaneseq
    %v1190 = vshrl.u32 %v1189, 7
    %v1191 = vsub.s32 1, %v1190
    %v1192 = vrot.slane %v1050, %v1191
    %v1193 = vmul.f32 %v285, %v1180
    %v1194 = vmul.f32 %v285, %v1184
    %v1195 = vmul.f32 %v285, %v1188
    %v1196 = vmul.f32 %v285, %v1192
    %v1197 = vmul.f32 %v289, %v1180
    %v1198 = vmul.f32 %v289, %v1184
    %v1199 = vmul.f32 %v289, %v1188
    %v1200 = vmul.f32 %v289, %v1192
    %v1201 = vmul.f32 %v293, %v1180
    %v1202 = vmul.f32 %v293, %v1184
    %v1203 = vmul.f32 %v293, %v1188
    %v1204 = vmul.f32 %v293, %v1192
    %v1205 = vmul.f32 %v297, %v1180
    %v1206 = vmul.f32 %v297, %v1184
    %v1207 = vmul.f32 %v297, %v1188
    %v1208 = vmul.f32 %v297, %v1192
    %v1209 = vadd.f32 %v1161, %v1193
    %v1210 = vadd.f32 %v1162, %v1194
    %v1211 = vadd.f32 %v1163, %v1195
    %v1212 = vadd.f32 %v1164, %v1196
    %v1213 = vadd.f32 %v1165, %v1197
    %v1214 = vadd.f32 %v1166, %v1198
    %v1215 = vadd.f32 %v1167, %v1199
    %v1216 = vadd.f32 %v1168, %v1200
    %v1217 = vadd.f32 %v1169, %v1201
    %v1218 = vadd.f32 %v1170, %v1202
    %v1219 = vadd.f32 %v1171, %v1203
    %v1220 = vadd.f32 %v1172, %v1204
    %v1221 = vadd.f32 %v1173, %v1205
    %v1222 = vadd.f32 %v1174, %v1206
    %v1223 = vadd.f32 %v1175, %v1207
    %v1224 = vadd.f32 %v1176, %v1208
    %v1225 = vlaneseq
    %v1226 = vshrl.u32 %v1225, 7
    %v1227 = vsub.s32 2, %v1226
    %v1228 = vrot.slane %v1047, %v1227
    %v1229 = vlaneseq
    %v1230 = vshrl.u32 %v1229, 7
    %v1231 = vsub.s32 2, %v1230
    %v1232 = vrot.slane %v1048, %v1231
    %v1233 = vlaneseq
    %v1234 = vshrl.u32 %v1233, 7
    %v1235 = vsub.s32 2, %v1234
    %v1236 = vrot.slane %v1049, %v1235
    %v1237 = vlaneseq
    %v1238 = vshrl.u32 %v1237, 7
    %v1239 = vsub.s32 2, %v1238
    %v1240 = vrot.slane %v1050, %v1239
    %v1241 = vmul.f32 %v349, %v1228
    %v1242 = vmul.f32 %v349, %v1232
    %v1243 = vmul.f32 %v349, %v1236
    %v1244 = vmul.f32 %v349, %v1240
    %v1245 = vmul.f32 %v353, %v1228
    %v1246 = vmul.f32 %v353, %v1232
    %v1247 = vmul.f32 %v353, %v1236
    %v1248 = vmul.f32 %v353, %v1240
    %v1249 = vmul.f32 %v357, %v1228
    %v1250 = vmul.f32 %v357, %v1232
    %v1251 = vmul.f32 %v357, %v1236
    %v1252 = vmul.f32 %v357, %v1240
    %v1253 = vmul.f32 %v361, %v1228
    %v1254 = vmul.f32 %v361, %v1232
    %v1255 = vmul.f32 %v361, %v1236
    %v1256 = vmul.f32 %v361, %v1240
    %v1257 = vadd.f32 %v1209, %v1241
    %v1258 = vadd.f32 %v1210, %v1242
    %v1259 = vadd.f32 %v1211, %v1243
    %v1260 = vadd.f32 %v1212, %v1244
    %v1261 = vadd.f32 %v1213, %v1245
    %v1262 = vadd.f32 %v1214, %v1246
    %v1263 = vadd.f32 %v1215, %v1247
    %v1264 = vadd.f32 %v1216, %v1248
    %v1265 = vadd.f32 %v1217, %v1249
    %v1266 = vadd.f32 %v1218, %v1250
    %v1267 = vadd.f32 %v1219, %v1251
    %v1268 = vadd.f32 %v1220, %v1252
    %v1269 = vadd.f32 %v1221, %v1253
    %v1270 = vadd.f32 %v1222, %v1254
    %v1271 = vadd.f32 %v1223, %v1255
    %v1272 = vadd.f32 %v1224, %v1256
    %v1273 = vmul.f32 %v1257, %v1257
    %v1274 = vmul.f32 %v1258, %v1258
    %v1275 = vmul.f32 %v1259, %v1259
    %v1276 = vmul.f32 %v1260, %v1260
    %v1277 = vmul.f32 %v1261, %v1261
    %v1278 = vmul.f32 %v1262, %v1262
    %v1279 = vmul.f32 %v1263, %v1263
    %v1280 = vmul.f32 %v1264, %v1264
    %v1281 = vmul.f32 %v1265, %v1265
    %v1282 = vmul.f32 %v1266, %v1266
    %v1283 = vmul.f32 %v1267, %v1267
    %v1284 = vmul.f32 %v1268, %v1268
    %v1285 = vmul.f32 %v1269, %v1269
    %v1286 = vmul.f32 %v1270, %v1270
    %v1287 = vmul.f32 %v1271, %v1271
    %v1288 = vmul.f32 %v1272, %v1272
    %v1289 = vmul.f32 %v1257, %v1273
    %v1290 = vmul.f32 %v1258, %v1274
    %v1291 = vmul.f32 %v1259, %v1275
    %v1292 = vmul.f32 %v1260, %v1276
    %v1293 = vmul.f32 %v1261, %v1277
    %v1294 = vmul.f32 %v1262, %v1278
    %v1295 = vmul.f32 %v1263, %v1279
    %v1296 = vmul.f32 %v1264, %v1280
    %v1297 = vmul.f32 %v1265, %v1281
    %v1298 = vmul.f32 %v1266, %v1282
    %v1299 = vmul.f32 %v1267, %v1283
    %v1300 = vmul.f32 %v1268, %v1284
    %v1301 = vmul.f32 %v1269, %v1285
    %v1302 = vmul.f32 %v1270, %v1286
    %v1303 = vmul.f32 %v1271, %v1287
    %v1304 = vmul.f32 %v1272, %v1288
    %v1305 = vmul.f32 %v1289, 0.044715
    %v1306 = vmul.f32 %v1290, 0.044715
    %v1307 = vmul.f32 %v1291, 0.044715
    %v1308 = vmul.f32 %v1292, 0.044715
    %v1309 = vmul.f32 %v1293, 0.044715
    %v1310 = vmul.f32 %v1294, 0.044715
    %v1311 = vmul.f32 %v1295, 0.044715
    %v1312 = vmul.f32 %v1296, 0.044715
    %v1313 = vmul.f32 %v1297, 0.044715
    %v1314 = vmul.f32 %v1298, 0.044715
    %v1315 = vmul.f32 %v1299, 0.044715
    %v1316 = vmul.f32 %v1300, 0.044715
    %v1317 = vmul.f32 %v1301, 0.044715
    %v1318 = vmul.f32 %v1302, 0.044715
    %v1319 = vmul.f32 %v1303, 0.044715
    %v1320 = vmul.f32 %v1304, 0.044715
    %v1321 = vadd.f32 %v1257, %v1305
    %v1322 = vadd.f32 %v1258, %v1306
    %v1323 = vadd.f32 %v1259, %v1307
    %v1324 = vadd.f32 %v1260, %v1308
    %v1325 = vadd.f32 %v1261, %v1309
    %v1326 = vadd.f32 %v1262, %v1310
    %v1327 = vadd.f32 %v1263, %v1311
    %v1328 = vadd.f32 %v1264, %v1312
    %v1329 = vadd.f32 %v1265, %v1313
    %v1330 = vadd.f32 %v1266, %v1314
    %v1331 = vadd.f32 %v1267, %v1315
    %v1332 = vadd.f32 %v1268, %v1316
    %v1333 = vadd.f32 %v1269, %v1317
    %v1334 = vadd.f32 %v1270, %v1318
    %v1335 = vadd.f32 %v1271, %v1319
    %v1336 = vadd.f32 %v1272, %v1320
    %v1337 = vmul.f32 %v1321, 0.7978846
    %v1338 = vmul.f32 %v1322, 0.7978846
    %v1339 = vmul.f32 %v1323, 0.7978846
    %v1340 = vmul.f32 %v1324, 0.7978846
    %v1341 = vmul.f32 %v1325, 0.7978846
    %v1342 = vmul.f32 %v1326, 0.7978846
    %v1343 = vmul.f32 %v1327, 0.7978846
    %v1344 = vmul.f32 %v1328, 0.7978846
    %v1345 = vmul.f32 %v1329, 0.7978846
    %v1346 = vmul.f32 %v1330, 0.7978846
    %v1347 = vmul.f32 %v1331, 0.7978846
    %v1348 = vmul.f32 %v1332, 0.7978846
    %v1349 = vmul.f32 %v1333, 0.7978846
    %v1350 = vmul.f32 %v1334, 0.7978846
    %v1351 = vmul.f32 %v1335, 0.7978846
    %v1352 = vmul.f32 %v1336, 0.7978846
    %v1353 = vtanh.pop %v1337
    %v1354 = vtanh.pop %v1338
    %v1355 = vtanh.pop %v1339
    %v1356 = vtanh.pop %v1340
    %v1357 = vtanh.pop %v1341
    %v1358 = vtanh.pop %v1342
    %v1359 = vtanh.pop %v1343
    %v1360 = vtanh.pop %v1344
    %v1361 = vtanh.pop %v1345
    %v1362 = vtanh.pop %v1346
    %v1363 = vtanh.pop %v1347
    %v1364 = vtanh.pop %v1348
    %v1365 = vtanh.pop %v1349
    %v1366 = vtanh.pop %v1350
    %v1367 = vtanh.pop %v1351
    %v1368 = vtanh.pop %v1352
    %v1369 = vadd.f32 %v1353, 1.0
    %v1370 = vadd.f32 %v1354, 1.0
    %v1371 = vadd.f32 %v1355, 1.0
    %v1372 = vadd.f32 %v1356, 1.0
    %v1373 = vadd.f32 %v1357, 1.0
    %v1374 = vadd.f32 %v1358, 1.0
    %v1375 = vadd.f32 %v1359, 1.0
    %v1376 = vadd.f32 %v1360, 1.0
    %v1377 = vadd.f32 %v1361, 1.0
    %v1378 = vadd.f32 %v1362, 1.0
    %v1379 = vadd.f32 %v1363, 1.0
    %v1380 = vadd.f32 %v1364, 1.0
    %v1381 = vadd.f32 %v1365, 1.0
    %v1382 = vadd.f32 %v1366, 1.0
    %v1383 = vadd.f32 %v1367, 1.0
    %v1384 = vadd.f32 %v1368, 1.0
    %v1385 = vmul.f32 %v1369, 0.5
    %v1386 = vmul.f32 %v1370, 0.5
    %v1387 = vmul.f32 %v1371, 0.5
    %v1388 = vmul.f32 %v1372, 0.5
    %v1389 = vmul.f32 %v1373, 0.5
    %v1390 = vmul.f32 %v1374, 0.5
    %v1391 = vmul.f32 %v1375, 0.5
    %v1392 = vmul.f32 %v1376, 0.5
    %v1393 = vmul.f32 %v1377, 0.5
    %v1394 = vmul.f32 %v1378, 0.5
    %v1395 = vmul.f32 %v1379, 0.5
    %v1396 = vmul.f32 %v1380, 0.5
    %v1397 = vmul.f32 %v1381, 0.5
    %v1398 = vmul.f32 %v1382, 0.5
    %v1399 = vmul.f32 %v1383, 0.5
    %v1400 = vmul.f32 %v1384, 0.5
    %v1401 = vmul.f32 %v1257, %v1385
    %v1402 = vmul.f32 %v1258, %v1386
    %v1403 = vmul.f32 %v1259, %v1387
    %v1404 = vmul.f32 %v1260, %v1388
    %v1405 = vmul.f32 %v1261, %v1389
    %v1406 = vmul.f32 %v1262, %v1390
    %v1407 = vmul.f32 %v1263, %v1391
    %v1408 = vmul.f32 %v1264, %v1392
    %v1409 = vmul.f32 %v1265, %v1393
    %v1410 = vmul.f32 %v1266, %v1394
    %v1411 = vmul.f32 %v1267, %v1395
    %v1412 = vmul.f32 %v1268, %v1396
    %v1413 = vmul.f32 %v1269, %v1397
    %v1414 = vmul.f32 %v1270, %v1398
    %v1415 = vmul.f32 %v1271, %v1399
    %v1416 = vmul.f32 %v1272, %v1400
    %v1417 = vmul.f32 %v1028, %v1047
    %v1418 = vmul.f32 %v1032, %v1048
    %v1419 = vmul.f32 %v1036, %v1049
    %v1420 = vmul.f32 %v1040, %v1050
    %v1421 = vmul.f32 %v562, %v1401
    %v1422 = vmul.f32 %v562, %v1402
    %v1423 = vmul.f32 %v562, %v1403
    %v1424 = vmul.f32 %v562, %v1404
    %v1425 = vmul.f32 %v567, %v1405
    %v1426 = vmul.f32 %v567, %v1406
    %v1427 = vmul.f32 %v567, %v1407
    %v1428 = vmul.f32 %v567, %v1408
    %v1429 = vmul.f32 %v572, %v1409
    %v1430 = vmul.f32 %v572, %v1410
    %v1431 = vmul.f32 %v572, %v1411
    %v1432 = vmul.f32 %v572, %v1412
    %v1433 = vmul.f32 %v577, %v1413
    %v1434 = vmul.f32 %v577, %v1414
    %v1435 = vmul.f32 %v577, %v1415
    %v1436 = vmul.f32 %v577, %v1416
    %v1437 = vadd.f32 %v1421, %v1425
    %v1438 = vadd.f32 %v1437, %v1429
    %v1439 = vadd.f32 %v1438, %v1433
    %v1440 = vrot.slane %v1439, 4
    %v1441 = vadd.f32 %v1439, %v1440
    %v1442 = vrot.slane %v1441, 2
    %v1443 = vadd.f32 %v1441, %v1442
    %v1444 = vrot.slane %v1443, 1
    %v1445 = vadd.f32 %v1443, %v1444
    %v1446 = vadd.f32 %v1422, %v1426
    %v1447 = vadd.f32 %v1446, %v1430
    %v1448 = vadd.f32 %v1447, %v1434
    %v1449 = vrot.slane %v1448, 4
    %v1450 = vadd.f32 %v1448, %v1449
    %v1451 = vrot.slane %v1450, 2
    %v1452 = vadd.f32 %v1450, %v1451
    %v1453 = vrot.slane %v1452, 1
    %v1454 = vadd.f32 %v1452, %v1453
    %v1455 = vadd.f32 %v1423, %v1427
    %v1456 = vadd.f32 %v1455, %v1431
    %v1457 = vadd.f32 %v1456, %v1435
    %v1458 = vrot.slane %v1457, 4
    %v1459 = vadd.f32 %v1457, %v1458
    %v1460 = vrot.slane %v1459, 2
    %v1461 = vadd.f32 %v1459, %v1460
    %v1462 = vrot.slane %v1461, 1
    %v1463 = vadd.f32 %v1461, %v1462
    %v1464 = vadd.f32 %v1424, %v1428
    %v1465 = vadd.f32 %v1464, %v1432
    %v1466 = vadd.f32 %v1465, %v1436
    %v1467 = vrot.slane %v1466, 4
    %v1468 = vadd.f32 %v1466, %v1467
    %v1469 = vrot.slane %v1468, 2
    %v1470 = vadd.f32 %v1468, %v1469
    %v1471 = vrot.slane %v1470, 1
    %v1472 = vadd.f32 %v1470, %v1471
    %v1473 = vadd.f32 %v1445, %v634
    %v1474 = vadd.f32 %v1454, %v634
    %v1475 = vadd.f32 %v1463, %v634
    %v1476 = vadd.f32 %v1472, %v634
    %v1481 = vcombine.low %v1473, %v1474
    %v1482 = vcombine.low %v1475, %v1476
    %v1483 = vrot.slane %v1481, 5
    %v1484 = vrot.slane %v1482, 5
    %v1487 = vmul.f32 %v1051, %v1483
    %v1488 = vmul.f32 %v1052, %v1484
    %v1491 = vlaneseq
    %v1492 = vshrl.u32 %v1491, 7
    %v1493 = vsub.s32 3, %v1492
    %v1494 = vrot.slane %v1487, %v1493
    %v1495 = vlaneseq
    %v1496 = vshrl.u32 %v1495, 7
    %v1497 = vsub.s32 7, %v1496
    %v1498 = vrot.slane %v1487, %v1497
    %v1499 = vlaneseq
    %v1500 = vshrl.u32 %v1499, 7
    %v1501 = vsub.s32 3, %v1500
    %v1502 = vrot.slane %v1488, %v1501
    %v1503 = vlaneseq
    %v1504 = vshrl.u32 %v1503, 7
    %v1505 = vsub.s32 7, %v1504
    %v1506 = vrot.slane %v1488, %v1505
    %v1511 = vadd.f32 %v1417, %v1494
    %v1512 = vadd.f32 %v1418, %v1498
    %v1513 = vadd.f32 %v1419, %v1502
    %v1514 = vadd.f32 %v1420, %v1506
    %v1519 = vcombine.low %v1511, %v1512
    %v1520 = vcombine.low %v1513, %v1514
    %v1522 = vunpack.c.l.s4 1966171168
    %v1523 = vunpack.c.0.s8 %v1522
    %v1524 = vlaneseq
    %v1525 = vshrl.u32 %v1524, 7
    %v1526 = vsub.s32 %v1523, %v1525
    %v1527 = vrot.slane %v1519, %v1526
    %v1529 = vunpack.c.l.s4 1966171168
    %v1530 = vunpack.c.0.s8 %v1529
    %v1531 = vlaneseq
    %v1532 = vshrl.u32 %v1531, 7
    %v1533 = vsub.s32 %v1530, %v1532
    %v1534 = vrot.slane %v1520, %v1533
    %v1535 = vcombine.low %v1527, %v1534
    %v1537 = vunpack.c.l.s4 1966171168
    %v1538 = vunpack.c.0.s8 %v1537
    %v1539 = vlaneseq
    %v1540 = vshrl.u32 %v1539, 7
    %v1541 = vsub.s32 %v1538, %v1540
    %v1542 = vrot.slane %v1535, %v1541
    %s1544 = scalar_lea.vmem [#allocation2], 16
    %1545 = vst.msk [vmem:[%s1544] ss:$4 sm:$0xf] %vm710, %v1542
    %v1546 = vmul.f32 %v714, %v1401
    %v1547 = vmul.f32 %v714, %v1402
    %v1548 = vmul.f32 %v714, %v1403
    %v1549 = vmul.f32 %v714, %v1404
    %v1550 = vmul.f32 %v718, %v1405
    %v1551 = vmul.f32 %v718, %v1406
    %v1552 = vmul.f32 %v718, %v1407
    %v1553 = vmul.f32 %v718, %v1408
    %v1554 = vmul.f32 %v722, %v1409
    %v1555 = vmul.f32 %v722, %v1410
    %v1556 = vmul.f32 %v722, %v1411
    %v1557 = vmul.f32 %v722, %v1412
    %v1558 = vmul.f32 %v726, %v1413
    %v1559 = vmul.f32 %v726, %v1414
    %v1560 = vmul.f32 %v726, %v1415
    %v1561 = vmul.f32 %v726, %v1416
    %v1562 = vadd.f32 %v1546, %v1550
    %v1563 = vadd.f32 %v1562, %v1554
    %v1564 = vadd.f32 %v1563, %v1558
    %v1565 = vrot.slane %v1564, 4
    %v1566 = vadd.f32 %v1564, %v1565
    %v1567 = vrot.slane %v1566, 2
    %v1568 = vadd.f32 %v1566, %v1567
    %v1569 = vrot.slane %v1568, 1
    %v1570 = vadd.f32 %v1568, %v1569
    %v1571 = vadd.f32 %v1547, %v1551
    %v1572 = vadd.f32 %v1571, %v1555
    %v1573 = vadd.f32 %v1572, %v1559
    %v1574 = vrot.slane %v1573, 4
    %v1575 = vadd.f32 %v1573, %v1574
    %v1576 = vrot.slane %v1575, 2
    %v1577 = vadd.f32 %v1575, %v1576
    %v1578 = vrot.slane %v1577, 1
    %v1579 = vadd.f32 %v1577, %v1578
    %v1580 = vadd.f32 %v1548, %v1552
    %v1581 = vadd.f32 %v1580, %v1556
    %v1582 = vadd.f32 %v1581, %v1560
    %v1583 = vrot.slane %v1582, 4
    %v1584 = vadd.f32 %v1582, %v1583
    %v1585 = vrot.slane %v1584, 2
    %v1586 = vadd.f32 %v1584, %v1585
    %v1587 = vrot.slane %v1586, 1
    %v1588 = vadd.f32 %v1586, %v1587
    %v1589 = vadd.f32 %v1549, %v1553
    %v1590 = vadd.f32 %v1589, %v1557
    %v1591 = vadd.f32 %v1590, %v1561
    %v1592 = vrot.slane %v1591, 4
    %v1593 = vadd.f32 %v1591, %v1592
    %v1594 = vrot.slane %v1593, 2
    %v1595 = vadd.f32 %v1593, %v1594
    %v1596 = vrot.slane %v1595, 1
    %v1597 = vadd.f32 %v1595, %v1596
    %v1598 = vadd.f32 %v1570, %v634
    %v1599 = vadd.f32 %v1579, %v634
    %v1600 = vadd.f32 %v1588, %v634
    %v1601 = vadd.f32 %v1597, %v634
    %v1606 = vcombine.low %v1598, %v1599
    %v1607 = vcombine.low %v1600, %v1601
    %v1608 = vrot.slane %v1606, 6
    %v1609 = vrot.slane %v1607, 6
    %v1612 = vmul.f32 %v1051, %v1608
    %v1613 = vmul.f32 %v1052, %v1609
    %v1616 = vlaneseq
    %v1617 = vshrl.u32 %v1616, 7
    %v1618 = vsub.s32 3, %v1617
    %v1619 = vrot.slane %v1612, %v1618
    %v1620 = vlaneseq
    %v1621 = vshrl.u32 %v1620, 7
    %v1622 = vsub.s32 7, %v1621
    %v1623 = vrot.slane %v1612, %v1622
    %v1624 = vlaneseq
    %v1625 = vshrl.u32 %v1624, 7
    %v1626 = vsub.s32 3, %v1625
    %v1627 = vrot.slane %v1613, %v1626
    %v1628 = vlaneseq
    %v1629 = vshrl.u32 %v1628, 7
    %v1630 = vsub.s32 7, %v1629
    %v1631 = vrot.slane %v1613, %v1630
    %v1636 = vadd.f32 %v1417, %v1619
    %v1637 = vadd.f32 %v1418, %v1623
    %v1638 = vadd.f32 %v1419, %v1627
    %v1639 = vadd.f32 %v1420, %v1631
    %v1644 = vcombine.low %v1636, %v1637
    %v1645 = vcombine.low %v1638, %v1639
    %v1647 = vunpack.c.l.s4 1966171168
    %v1648 = vunpack.c.0.s8 %v1647
    %v1649 = vlaneseq
    %v1650 = vshrl.u32 %v1649, 7
    %v1651 = vsub.s32 %v1648, %v1650
    %v1652 = vrot.slane %v1644, %v1651
    %v1654 = vunpack.c.l.s4 1966171168
    %v1655 = vunpack.c.0.s8 %v1654
    %v1656 = vlaneseq
    %v1657 = vshrl.u32 %v1656, 7
    %v1658 = vsub.s32 %v1655, %v1657
    %v1659 = vrot.slane %v1645, %v1658
    %v1660 = vcombine.high %v1652, %v1659
    %v1662 = vunpack.c.l.s4 1966171168
    %v1663 = vunpack.c.0.s8 %v1662
    %v1664 = vlaneseq
    %v1665 = vshrl.u32 %v1664, 7
    %v1666 = vsub.s32 %v1663, %v1665
    %v1667 = vrot.slane %v1660, %v1666
    %s1669 = scalar_lea.vmem [#allocation2], 17
    %1670 = vst.msk [vmem:[%s1669] ss:$4 sm:$0xf] %vm710, %v1667
    %v1671 = vmul.f32 %v855, %v1401
    %v1672 = vmul.f32 %v855, %v1402
    %v1673 = vmul.f32 %v855, %v1403
    %v1674 = vmul.f32 %v855, %v1404
    %v1675 = vmul.f32 %v859, %v1405
    %v1676 = vmul.f32 %v859, %v1406
    %v1677 = vmul.f32 %v859, %v1407
    %v1678 = vmul.f32 %v859, %v1408
    %v1679 = vmul.f32 %v863, %v1409
    %v1680 = vmul.f32 %v863, %v1410
    %v1681 = vmul.f32 %v863, %v1411
    %v1682 = vmul.f32 %v863, %v1412
    %v1683 = vmul.f32 %v867, %v1413
    %v1684 = vmul.f32 %v867, %v1414
    %v1685 = vmul.f32 %v867, %v1415
    %v1686 = vmul.f32 %v867, %v1416
    %v1687 = vadd.f32 %v1671, %v1675
    %v1688 = vadd.f32 %v1687, %v1679
    %v1689 = vadd.f32 %v1688, %v1683
    %v1690 = vrot.slane %v1689, 4
    %v1691 = vadd.f32 %v1689, %v1690
    %v1692 = vrot.slane %v1691, 2
    %v1693 = vadd.f32 %v1691, %v1692
    %v1694 = vrot.slane %v1693, 1
    %v1695 = vadd.f32 %v1693, %v1694
    %v1696 = vadd.f32 %v1672, %v1676
    %v1697 = vadd.f32 %v1696, %v1680
    %v1698 = vadd.f32 %v1697, %v1684
    %v1699 = vrot.slane %v1698, 4
    %v1700 = vadd.f32 %v1698, %v1699
    %v1701 = vrot.slane %v1700, 2
    %v1702 = vadd.f32 %v1700, %v1701
    %v1703 = vrot.slane %v1702, 1
    %v1704 = vadd.f32 %v1702, %v1703
    %v1705 = vadd.f32 %v1673, %v1677
    %v1706 = vadd.f32 %v1705, %v1681
    %v1707 = vadd.f32 %v1706, %v1685
    %v1708 = vrot.slane %v1707, 4
    %v1709 = vadd.f32 %v1707, %v1708
    %v1710 = vrot.slane %v1709, 2
    %v1711 = vadd.f32 %v1709, %v1710
    %v1712 = vrot.slane %v1711, 1
    %v1713 = vadd.f32 %v1711, %v1712
    %v1714 = vadd.f32 %v1674, %v1678
    %v1715 = vadd.f32 %v1714, %v1682
    %v1716 = vadd.f32 %v1715, %v1686
    %v1717 = vrot.slane %v1716, 4
    %v1718 = vadd.f32 %v1716, %v1717
    %v1719 = vrot.slane %v1718, 2
    %v1720 = vadd.f32 %v1718, %v1719
    %v1721 = vrot.slane %v1720, 1
    %v1722 = vadd.f32 %v1720, %v1721
    %v1723 = vadd.f32 %v1695, %v634
    %v1724 = vadd.f32 %v1704, %v634
    %v1725 = vadd.f32 %v1713, %v634
    %v1726 = vadd.f32 %v1722, %v634
    %v1731 = vcombine.low %v1723, %v1724
    %v1732 = vcombine.low %v1725, %v1726
    %v1733 = vrot.slane %v1731, 7
    %v1734 = vrot.slane %v1732, 7
    %v1737 = vmul.f32 %v1051, %v1733
    %v1738 = vmul.f32 %v1052, %v1734
    %v1741 = vlaneseq
    %v1742 = vshrl.u32 %v1741, 7
    %v1743 = vsub.s32 3, %v1742
    %v1744 = vrot.slane %v1737, %v1743
    %v1745 = vlaneseq
    %v1746 = vshrl.u32 %v1745, 7
    %v1747 = vsub.s32 7, %v1746
    %v1748 = vrot.slane %v1737, %v1747
    %v1749 = vlaneseq
    %v1750 = vshrl.u32 %v1749, 7
    %v1751 = vsub.s32 3, %v1750
    %v1752 = vrot.slane %v1738, %v1751
    %v1753 = vlaneseq
    %v1754 = vshrl.u32 %v1753, 7
    %v1755 = vsub.s32 7, %v1754
    %v1756 = vrot.slane %v1738, %v1755
    %v1761 = vadd.f32 %v1417, %v1744
    %v1762 = vadd.f32 %v1418, %v1748
    %v1763 = vadd.f32 %v1419, %v1752
    %v1764 = vadd.f32 %v1420, %v1756
    %v1769 = vcombine.low %v1761, %v1762
    %v1770 = vcombine.low %v1763, %v1764
    %v1772 = vunpack.c.l.s4 1966171168
    %v1773 = vunpack.c.0.s8 %v1772
    %v1774 = vlaneseq
    %v1775 = vshrl.u32 %v1774, 7
    %v1776 = vsub.s32 %v1773, %v1775
    %v1777 = vrot.slane %v1769, %v1776
    %v1779 = vunpack.c.l.s4 1966171168
    %v1780 = vunpack.c.0.s8 %v1779
    %v1781 = vlaneseq
    %v1782 = vshrl.u32 %v1781, 7
    %v1783 = vsub.s32 %v1780, %v1782
    %v1784 = vrot.slane %v1770, %v1783
    %v1785 = vcombine.low %v1777, %v1784
    %v1787 = vunpack.c.l.s4 1966171168
    %v1788 = vunpack.c.0.s8 %v1787
    %v1789 = vlaneseq
    %v1790 = vshrl.u32 %v1789, 7
    %v1791 = vsub.s32 %v1788, %v1790
    %v1792 = vrot.slane %v1785, %v1791
    %v1793 = vcombine.high %v1792, %v1792
    %s1795 = scalar_lea.vmem [#allocation2], 18
    %1796 = vst.msk [vmem:[%s1795] ss:$4 sm:$0xf] %vm710, %v1793
    // Predicated region
    $region26: #{tpu_custom_call.1} parent=1 // pred_check
      _
    $region27: #{tpu_custom_call.1} parent=1 // pred_check_branch
      %1798 = sbr.rel (0) target = $region29
    $region28: #{tpu_custom_call.1} parent=1 // pred_region
      %s1800 = ssub.s32 512, 512
      %1801 = vsyncadd [#allocation3], %s1800
      %s1803 = sshll.u32 [#allocation2], 4
      %s1804 = int_to_ptr.vmem [resolvable:$true] %s1803
      %1806 = dma.vmem_to_hbm [thread:$0]  %s1804, 512, %s6, [#allocation3]
    $region29: #{tpu_custom_call.1} parent=1 // pred_fallthru
      _
    // Predicated region
    $region30: #{tpu_custom_call.1} parent=1 // pred_check
      _
    $region31: #{tpu_custom_call.1} parent=1 // pred_check_branch
      %1808 = sbr.rel (0) target = $region33
    $region32: #{tpu_custom_call.1} parent=1 // pred_region
      %1809 = dma.done [#allocation3], 512
    $region33: #{tpu_custom_call.1} parent=1 // pred_fallthru
      _
    %1810 = vsyncpa [#allocation3], 1

</llo_original>
